<compile_context>
chip_gen: v5e
topology: v5e:2x2
jax: 0.10.0
libtpu: 0.0.40
codegen_flags: <defaults>
</compile_context>

<pallas_src>
import math

import jax
import jax.numpy as jnp
from jax import lax
from jax.experimental import pallas as pl
from jax.experimental.pallas import tpu as pltpu  # noqa: F401  (TPU backend)

# ----------------------------- config ---------------------------------------
B = 2            # batch
S = 8            # sequence length
H = 32           # hidden size   (BERT: 768)
NH = 4           # num heads     (BERT: 12)
DH = H // NH     # head dim
I = 4 * H        # intermediate  (BERT: 3072)
L = 2            # num layers    (BERT: 12)
VOCAB = 100
TYPE_VOCAB = 2
MAX_POS = 16
NUM_CLASSES = 3
LN_EPS = 1e-12   # BERT default
OUT_LANES = 128  # lane-dense padded classifier output width


# ----------------------------- fused kernel ---------------------------------
def _bert_kernel(
    x_ref, bias_ref,                       # (B*S, H) activations / (B*S, B*S) mask
    emb_g_ref, emb_b_ref,                  # embedding LayerNorm (1, H)
    qkv_w_ref, qkv_b_ref,                  # (L, H, 3H) bf16 / (L, 1, 3H) f32
    ao_w_ref, ao_b_ref,                    # (L, H, H) bf16 / (L, 1, H)
    ln1_g_ref, ln1_b_ref,                  # (L, 1, H)
    ffn_iw_ref, ffn_ib_ref,                # (L, H, I) bf16 / (L, 1, I)
    ffn_ow_ref, ffn_ob_ref,                # (L, I, H) bf16 / (L, 1, H)
    ln2_g_ref, ln2_b_ref,                  # (L, 1, H)
    fc_w_ref, fc_b_ref,                    # (H, 128) f32 / (1, 128) f32 (padded)
    out_ref,                               # (B*S, 128) f32 lane-dense
):
    """Whole batch, whole encoder, classifier head: one invocation, all
    activations VMEM-resident."""
    scale = 1.0 / math.sqrt(DH)

    def layer_norm(v, g, b):               # f32, eps inside rsqrt (BERT style)
        mu = jnp.mean(v, axis=-1, keepdims=True)
        vc = v - mu
        var = jnp.mean(vc * vc, axis=-1, keepdims=True)
        return vc * lax.rsqrt(var + LN_EPS) * g + b

    def mm(a_f32, w_bf16):                 # bf16 MXU operands, f32 accumulation
        return jnp.dot(a_f32.astype(jnp.bfloat16), w_bf16,
                       preferred_element_type=jnp.float32)

    def gelu(v):                           # tanh-approx GELU
        # TODO(synk): BERT reference uses erf-GELU; tanh approximation here.
        c = math.sqrt(2.0 / math.pi)
        return 0.5 * v * (1.0 + jnp.tanh(c * (v + 0.044715 * v * v * v)))

    bias = bias_ref[...]                              # (B*S, B*S) additive mask
    x = layer_norm(x_ref[...], emb_g_ref[...], emb_b_ref[...])   # (B*S, H)

    for li in range(L):                               # unrolled, L == 2
        # ---- fused QKV projection: one MXU pass, 3H output lanes ----
        qkv = mm(x, qkv_w_ref[li]) + qkv_b_ref[li]    # (B*S, 3H) f32

        # ---- multi-head attention; whole batch per head, block-diag mask ----
        ctx_heads = []
        for h in range(NH):
            qh = qkv[:, h * DH:(h + 1) * DH]                      # (B*S, DH)
            kh = qkv[:, H + h * DH:H + (h + 1) * DH]
            vh = qkv[:, 2 * H + h * DH:2 * H + (h + 1) * DH]
            # q·k^T without an explicit transpose (contract last dims of both).
            s = lax.dot_general(qh, kh, (((1,), (1,)), ((), ())),
                                preferred_element_type=jnp.float32)
            s = s * scale + bias                                  # (B*S, B*S)
            s = s - jnp.max(s, axis=-1, keepdims=True)
            p = jnp.exp(s)
            p = p * pl.reciprocal(jnp.sum(p, axis=-1, keepdims=True), approx=True)
            ctx_heads.append(jnp.dot(p, vh, preferred_element_type=jnp.float32))
        ctx = jnp.concatenate(ctx_heads, axis=1)                  # (B*S, H)

        # ---- single output projection matmul + residual + LayerNorm ----
        attn = mm(ctx, ao_w_ref[li]) + ao_b_ref[li]
        x = layer_norm(attn + x, ln1_g_ref[li], ln1_b_ref[li])

        # ---- FFN with GELU + residual + LayerNorm ----
        hdn = gelu(mm(x, ffn_iw_ref[li]) + ffn_ib_ref[li])        # (B*S, I)
        ffn = mm(hdn, ffn_ow_ref[li]) + ffn_ob_ref[li]            # (B*S, H)
        x = layer_norm(ffn + x, ln2_g_ref[li], ln2_b_ref[li])

    # ---- classifier head, lane-dense (128-lane padded) store ----
    out_ref[...] = jnp.dot(x, fc_w_ref[...],
                           preferred_element_type=jnp.float32) + fc_b_ref[...]


def encoder_forward(x_folded, bias, enc_packed):
    """x_folded: (B*S, H) f32; bias: (B*S, B*S) additive mask."""
    return pl.pallas_call(
        _bert_kernel,
        out_shape=jax.ShapeDtypeStruct((B * S, OUT_LANES), jnp.float32),
    )(x_folded, bias, *enc_packed)


# --------------------------- params & packing --------------------------------
def init_params(key):
    def dense(k, fan_in, fan_out):
        kw, kb = jax.random.split(k)
        return (jax.random.normal(kw, (fan_in, fan_out), jnp.float32) * 0.02,
                jnp.zeros((fan_out,), jnp.float32))

    keys = jax.random.split(key, 8 + L)
    params = {
        "word_emb": jax.random.normal(keys[0], (VOCAB, H), jnp.float32) * 0.02,
        "pos_emb": jax.random.normal(keys[1], (MAX_POS, H), jnp.float32) * 0.02,
        "type_emb": jax.random.normal(keys[2], (TYPE_VOCAB, H), jnp.float32) * 0.02,
        "emb_ln_g": jnp.ones((H,), jnp.float32),
        "emb_ln_b": jnp.zeros((H,), jnp.float32),
    }
    layers = []
    for li in range(L):
        ks = jax.random.split(keys[3 + li], 6)
        layer = {}
        layer["q_w"], layer["q_b"] = dense(ks[0], H, H)
        layer["k_w"], layer["k_b"] = dense(ks[1], H, H)
        layer["v_w"], layer["v_b"] = dense(ks[2], H, H)
        layer["ao_w"], layer["ao_b"] = dense(ks[3], H, H)
        layer["ln1_g"], layer["ln1_b"] = jnp.ones((H,)), jnp.zeros((H,))
        layer["i_w"], layer["i_b"] = dense(ks[4], H, I)
        layer["o_w"], layer["o_b"] = dense(ks[5], I, H)
        layer["ln2_g"], layer["ln2_b"] = jnp.ones((H,)), jnp.zeros((H,))
        layers.append(layer)
    params["layers"] = layers
    params["fc_w"], params["fc_b"] = dense(keys[3 + L], H, NUM_CLASSES)
    return params


def pack_model(params):
    """One-time (outside jit) packing: stack per-layer weights, fuse Q/K/V,
    pre-cast matmul weights to bf16, pad classifier to 128 output lanes."""
    layers = params["layers"]
    stack = lambda f: jnp.stack([f(l) for l in layers], axis=0)

    fc_w_pad = jnp.zeros((H, OUT_LANES), jnp.float32)
    fc_w_pad = fc_w_pad.at[:, :NUM_CLASSES].set(params["fc_w"])
    fc_b_pad = jnp.zeros((1, OUT_LANES), jnp.float32)
    fc_b_pad = fc_b_pad.at[:, :NUM_CLASSES].set(params["fc_b"].reshape(1, NUM_CLASSES))

    enc_packed = (
        params["emb_ln_g"].reshape(1, H),
        params["emb_ln_b"].reshape(1, H),
        stack(lambda l: jnp.concatenate(
            [l["q_w"], l["k_w"], l["v_w"]], axis=1)).astype(jnp.bfloat16),    # (L,H,3H)
        stack(lambda l: jnp.concatenate(
            [l["q_b"], l["k_b"], l["v_b"]]).reshape(1, 3 * H)),               # (L,1,3H)
        stack(lambda l: l["ao_w"]).astype(jnp.bfloat16),                      # (L,H,H)
        stack(lambda l: l["ao_b"].reshape(1, H)),
        stack(lambda l: l["ln1_g"].reshape(1, H)),
        stack(lambda l: l["ln1_b"].reshape(1, H)),
        stack(lambda l: l["i_w"]).astype(jnp.bfloat16),                       # (L,H,I)
        stack(lambda l: l["i_b"].reshape(1, I)),
        stack(lambda l: l["o_w"]).astype(jnp.bfloat16),                       # (L,I,H)
        stack(lambda l: l["o_b"].reshape(1, H)),
        stack(lambda l: l["ln2_g"].reshape(1, H)),
        stack(lambda l: l["ln2_b"].reshape(1, H)),
        fc_w_pad,
        fc_b_pad,
    )
    emb_tables = (params["word_emb"], params["pos_emb"], params["type_emb"])
    return emb_tables, enc_packed


# ------------------------------ forward ---------------------------------------
@jax.jit
def model_forward(emb_tables, enc_packed, input_ids, attention_mask, token_type_ids):
    word_emb, pos_emb, type_emb = emb_tables

    # Embedding lookups (gather) stay in plain JAX/XLA glue.
    positions = jnp.arange(S)
    x = (jnp.take(word_emb, input_ids, axis=0)
         + jnp.take(pos_emb, positions, axis=0)[None, :, :]
         + jnp.take(type_emb, token_type_ids, axis=0))            # (B, S, H)
    x = x.reshape(B * S, H)                                       # fold batch

    # Block-diagonal additive mask for the folded layout:
    #   -1e9 for cross-batch pairs (no leakage) and for padded key positions.
    batch_idx = jnp.arange(B * S) // S
    same_batch = batch_idx[:, None] == batch_idx[None, :]
    key_ok = attention_mask.reshape(B * S).astype(bool)
    bias = jnp.where(same_batch & key_ok[None, :], 0.0, -1e9).astype(jnp.float32)

    logits_all = encoder_forward(x, bias, enc_packed)             # (B*S, 128)
    return logits_all[0::S, :NUM_CLASSES]                         # CLS rows -> (B, C)


# ------------------------------ main ------------------------------------------
if __name__ == "__main__":
    key = jax.random.PRNGKey(0)
    k_param, k_ids, k_tt = jax.random.split(key, 3)

    params = init_params(k_param)
    emb_tables, enc_packed = pack_model(params)   # packed ONCE, outside the jit

    input_ids = jax.random.randint(k_ids, (B, S), 0, VOCAB, dtype=jnp.int32)
    token_type_ids = jax.random.randint(k_tt, (B, S), 0, TYPE_VOCAB, dtype=jnp.int32)
    attention_mask = jnp.ones((B, S), dtype=jnp.int32)
    # mask out the last two tokens of batch element 1 to exercise the mask path
    attention_mask = attention_mask.at[1, -2:].set(0)

    logits = model_forward(emb_tables, enc_packed, input_ids,
                           attention_mask, token_type_ids)
    logits = jax.block_until_ready(logits)
    assert logits.shape == (B, NUM_CLASSES) and logits.dtype == jnp.float32
    assert bool(jnp.all(jnp.isfinite(logits)))
    print("KERNEL_OK")
</pallas_src>

<mosaic_0001>
module attributes {stable_mosaic.version = 11 : i64} {
  func.func @_bert_kernel(%arg0: memref<16x32xf32, #tpu.memory_space<vmem>>, %arg1: memref<16x16xf32, #tpu.memory_space<vmem>>, %arg2: memref<1x32xf32, #tpu.memory_space<vmem>>, %arg3: memref<1x32xf32, #tpu.memory_space<vmem>>, %arg4: memref<2x32x96xbf16, #tpu.memory_space<vmem>>, %arg5: memref<2x1x96xf32, #tpu.memory_space<vmem>>, %arg6: memref<2x32x32xbf16, #tpu.memory_space<vmem>>, %arg7: memref<2x1x32xf32, #tpu.memory_space<vmem>>, %arg8: memref<2x1x32xf32, #tpu.memory_space<vmem>>, %arg9: memref<2x1x32xf32, #tpu.memory_space<vmem>>, %arg10: memref<2x32x128xbf16, #tpu.memory_space<vmem>>, %arg11: memref<2x1x128xf32, #tpu.memory_space<vmem>>, %arg12: memref<2x128x32xbf16, #tpu.memory_space<vmem>>, %arg13: memref<2x1x32xf32, #tpu.memory_space<vmem>>, %arg14: memref<2x1x32xf32, #tpu.memory_space<vmem>>, %arg15: memref<2x1x32xf32, #tpu.memory_space<vmem>>, %arg16: memref<32x128xf32, #tpu.memory_space<vmem>>, %arg17: memref<1x128xf32, #tpu.memory_space<vmem>>, %arg18: memref<16x128xf32, #tpu.memory_space<vmem>>) attributes {dimension_semantics = [], scalar_prefetch = 0 : i64, scratch_operands = 0 : i64, tpu.core_type = #tpu.core_type<tc>} {
    %c0 = arith.constant 0 : index
    %c0_0 = arith.constant 0 : index
    %0 = vector.load %arg1[%c0, %c0_0] : memref<16x16xf32, #tpu.memory_space<vmem>>, vector<16x16xf32>
    %c0_1 = arith.constant 0 : index
    %c0_2 = arith.constant 0 : index
    %1 = vector.load %arg0[%c0_1, %c0_2] : memref<16x32xf32, #tpu.memory_space<vmem>>, vector<16x32xf32>
    %c0_3 = arith.constant 0 : index
    %c0_4 = arith.constant 0 : index
    %2 = vector.load %arg2[%c0_3, %c0_4] : memref<1x32xf32, #tpu.memory_space<vmem>>, vector<1x32xf32>
    %c0_5 = arith.constant 0 : index
    %c0_6 = arith.constant 0 : index
    %3 = vector.load %arg3[%c0_5, %c0_6] : memref<1x32xf32, #tpu.memory_space<vmem>>, vector<1x32xf32>
    %cst = arith.constant dense<0.000000e+00> : vector<16xf32>
    %4 = vector.multi_reduction <add>, %1, %cst [1] : vector<16x32xf32> to vector<16xf32>
    %5 = vector.shape_cast %4 : vector<16xf32> to vector<16x1xf32>
    %cst_7 = arith.constant 3.200000e+01 : f32
    %6 = vector.broadcast %cst_7 : f32 to vector<16x1xf32>
    %7 = arith.divf %5, %6 : vector<16x1xf32>
    %8 = vector.broadcast %7 : vector<16x1xf32> to vector<16x32xf32>
    %9 = arith.subf %1, %8 : vector<16x32xf32>
    %10 = arith.mulf %9, %9 : vector<16x32xf32>
    %cst_8 = arith.constant dense<0.000000e+00> : vector<16xf32>
    %11 = vector.multi_reduction <add>, %10, %cst_8 [1] : vector<16x32xf32> to vector<16xf32>
    %12 = vector.shape_cast %11 : vector<16xf32> to vector<16x1xf32>
    %cst_9 = arith.constant 3.200000e+01 : f32
    %13 = vector.broadcast %cst_9 : f32 to vector<16x1xf32>
    %14 = arith.divf %12, %13 : vector<16x1xf32>
    %cst_10 = arith.constant 9.99999996E-13 : f32
    %15 = vector.broadcast %cst_10 : f32 to vector<16x1xf32>
    %16 = arith.addf %14, %15 : vector<16x1xf32>
    %17 = math.rsqrt %16 : vector<16x1xf32>
    %18 = vector.broadcast %17 : vector<16x1xf32> to vector<16x32xf32>
    %19 = arith.mulf %9, %18 : vector<16x32xf32>
    %20 = vector.broadcast %2 : vector<1x32xf32> to vector<16x32xf32>
    %21 = arith.mulf %19, %20 : vector<16x32xf32>
    %22 = vector.broadcast %3 : vector<1x32xf32> to vector<16x32xf32>
    %23 = arith.addf %21, %22 : vector<16x32xf32>
    %c0_11 = arith.constant 0 : index
    %c0_12 = arith.constant 0 : index
    %c0_13 = arith.constant 0 : index
    %24 = vector.load %arg4[%c0_11, %c0_12, %c0_13] : memref<2x32x96xbf16, #tpu.memory_space<vmem>>, vector<1x32x96xbf16>
    %25 = vector.shape_cast %24 : vector<1x32x96xbf16> to vector<32x96xbf16>
    %26 = arith.truncf %23 : vector<16x32xf32> to vector<16x32xbf16>
    %cst_14 = arith.constant dense<0.000000e+00> : vector<16x96xf32>
    %27 = tpu.matmul %26, %25, %cst_14 {dimension_numbers = #tpu.dot_dimension_numbers<[1], [0], [0], [1], [0, 0, 1, 1], [], []>} : vector<16x32xbf16>, vector<32x96xbf16>, vector<16x96xf32> -> vector<16x96xf32>
    %c0_15 = arith.constant 0 : index
    %c0_16 = arith.constant 0 : index
    %c0_17 = arith.constant 0 : index
    %28 = vector.load %arg5[%c0_15, %c0_16, %c0_17] : memref<2x1x96xf32, #tpu.memory_space<vmem>>, vector<1x1x96xf32>
    %29 = vector.shape_cast %28 : vector<1x1x96xf32> to vector<1x96xf32>
    %30 = vector.broadcast %29 : vector<1x96xf32> to vector<16x96xf32>
    %31 = arith.addf %27, %30 : vector<16x96xf32>
    %32 = vector.extract_strided_slice %31 {offsets = [0, 0], sizes = [16, 8], strides = [1, 1]} : vector<16x96xf32> to vector<16x8xf32>
    %33 = vector.extract_strided_slice %31 {offsets = [0, 32], sizes = [16, 8], strides = [1, 1]} : vector<16x96xf32> to vector<16x8xf32>
    %34 = vector.extract_strided_slice %31 {offsets = [0, 64], sizes = [16, 8], strides = [1, 1]} : vector<16x96xf32> to vector<16x8xf32>
    %cst_18 = arith.constant dense<0.000000e+00> : vector<16x16xf32>
    %35 = tpu.matmul %32, %33, %cst_18 {dimension_numbers = #tpu.dot_dimension_numbers<[1], [1], [0], [0], [0, 0, 1, 0], [], []>} : vector<16x8xf32>, vector<16x8xf32>, vector<16x16xf32> -> vector<16x16xf32>
    %cst_19 = arith.constant 0.353553385 : f32
    %36 = vector.broadcast %cst_19 : f32 to vector<16x16xf32>
    %37 = arith.mulf %35, %36 : vector<16x16xf32>
    %38 = arith.addf %37, %0 : vector<16x16xf32>
    %cst_20 = arith.constant dense<0xFF800000> : vector<16xf32>
    %39 = vector.multi_reduction <maximumf>, %38, %cst_20 [1] : vector<16x16xf32> to vector<16xf32>
    %40 = vector.shape_cast %39 : vector<16xf32> to vector<16x1xf32>
    %41 = vector.broadcast %40 : vector<16x1xf32> to vector<16x16xf32>
    %42 = arith.subf %38, %41 : vector<16x16xf32>
    %43 = math.exp %42 : vector<16x16xf32>
    %cst_21 = arith.constant dense<0.000000e+00> : vector<16xf32>
    %44 = vector.multi_reduction <add>, %43, %cst_21 [1] : vector<16x16xf32> to vector<16xf32>
    %45 = vector.shape_cast %44 : vector<16xf32> to vector<16x1xf32>
    %46 = tpu.reciprocal %45 {approx = true} : vector<16x1xf32> -> vector<16x1xf32>
    %47 = vector.broadcast %46 : vector<16x1xf32> to vector<16x16xf32>
    %48 = arith.mulf %43, %47 : vector<16x16xf32>
    %cst_22 = arith.constant dense<0.000000e+00> : vector<16x8xf32>
    %49 = tpu.matmul %48, %34, %cst_22 {dimension_numbers = #tpu.dot_dimension_numbers<[1], [0], [0], [1], [0, 0, 1, 1], [], []>} : vector<16x16xf32>, vector<16x8xf32>, vector<16x8xf32> -> vector<16x8xf32>
    %50 = vector.extract_strided_slice %31 {offsets = [0, 8], sizes = [16, 8], strides = [1, 1]} : vector<16x96xf32> to vector<16x8xf32>
    %51 = vector.extract_strided_slice %31 {offsets = [0, 40], sizes = [16, 8], strides = [1, 1]} : vector<16x96xf32> to vector<16x8xf32>
    %52 = vector.extract_strided_slice %31 {offsets = [0, 72], sizes = [16, 8], strides = [1, 1]} : vector<16x96xf32> to vector<16x8xf32>
    %cst_23 = arith.constant dense<0.000000e+00> : vector<16x16xf32>
    %53 = tpu.matmul %50, %51, %cst_23 {dimension_numbers = #tpu.dot_dimension_numbers<[1], [1], [0], [0], [0, 0, 1, 0], [], []>} : vector<16x8xf32>, vector<16x8xf32>, vector<16x16xf32> -> vector<16x16xf32>
    %cst_24 = arith.constant 0.353553385 : f32
    %54 = vector.broadcast %cst_24 : f32 to vector<16x16xf32>
    %55 = arith.mulf %53, %54 : vector<16x16xf32>
    %56 = arith.addf %55, %0 : vector<16x16xf32>
    %cst_25 = arith.constant dense<0xFF800000> : vector<16xf32>
    %57 = vector.multi_reduction <maximumf>, %56, %cst_25 [1] : vector<16x16xf32> to vector<16xf32>
    %58 = vector.shape_cast %57 : vector<16xf32> to vector<16x1xf32>
    %59 = vector.broadcast %58 : vector<16x1xf32> to vector<16x16xf32>
    %60 = arith.subf %56, %59 : vector<16x16xf32>
    %61 = math.exp %60 : vector<16x16xf32>
    %cst_26 = arith.constant dense<0.000000e+00> : vector<16xf32>
    %62 = vector.multi_reduction <add>, %61, %cst_26 [1] : vector<16x16xf32> to vector<16xf32>
    %63 = vector.shape_cast %62 : vector<16xf32> to vector<16x1xf32>
    %64 = tpu.reciprocal %63 {approx = true} : vector<16x1xf32> -> vector<16x1xf32>
    %65 = vector.broadcast %64 : vector<16x1xf32> to vector<16x16xf32>
    %66 = arith.mulf %61, %65 : vector<16x16xf32>
    %cst_27 = arith.constant dense<0.000000e+00> : vector<16x8xf32>
    %67 = tpu.matmul %66, %52, %cst_27 {dimension_numbers = #tpu.dot_dimension_numbers<[1], [0], [0], [1], [0, 0, 1, 1], [], []>} : vector<16x16xf32>, vector<16x8xf32>, vector<16x8xf32> -> vector<16x8xf32>
    %68 = vector.extract_strided_slice %31 {offsets = [0, 16], sizes = [16, 8], strides = [1, 1]} : vector<16x96xf32> to vector<16x8xf32>
    %69 = vector.extract_strided_slice %31 {offsets = [0, 48], sizes = [16, 8], strides = [1, 1]} : vector<16x96xf32> to vector<16x8xf32>
    %70 = vector.extract_strided_slice %31 {offsets = [0, 80], sizes = [16, 8], strides = [1, 1]} : vector<16x96xf32> to vector<16x8xf32>
    %cst_28 = arith.constant dense<0.000000e+00> : vector<16x16xf32>
    %71 = tpu.matmul %68, %69, %cst_28 {dimension_numbers = #tpu.dot_dimension_numbers<[1], [1], [0], [0], [0, 0, 1, 0], [], []>} : vector<16x8xf32>, vector<16x8xf32>, vector<16x16xf32> -> vector<16x16xf32>
    %cst_29 = arith.constant 0.353553385 : f32
    %72 = vector.broadcast %cst_29 : f32 to vector<16x16xf32>
    %73 = arith.mulf %71, %72 : vector<16x16xf32>
    %74 = arith.addf %73, %0 : vector<16x16xf32>
    %cst_30 = arith.constant dense<0xFF800000> : vector<16xf32>
    %75 = vector.multi_reduction <maximumf>, %74, %cst_30 [1] : vector<16x16xf32> to vector<16xf32>
    %76 = vector.shape_cast %75 : vector<16xf32> to vector<16x1xf32>
    %77 = vector.broadcast %76 : vector<16x1xf32> to vector<16x16xf32>
    %78 = arith.subf %74, %77 : vector<16x16xf32>
    %79 = math.exp %78 : vector<16x16xf32>
    %cst_31 = arith.constant dense<0.000000e+00> : vector<16xf32>
    %80 = vector.multi_reduction <add>, %79, %cst_31 [1] : vector<16x16xf32> to vector<16xf32>
    %81 = vector.shape_cast %80 : vector<16xf32> to vector<16x1xf32>
    %82 = tpu.reciprocal %81 {approx = true} : vector<16x1xf32> -> vector<16x1xf32>
    %83 = vector.broadcast %82 : vector<16x1xf32> to vector<16x16xf32>
    %84 = arith.mulf %79, %83 : vector<16x16xf32>
    %cst_32 = arith.constant dense<0.000000e+00> : vector<16x8xf32>
    %85 = tpu.matmul %84, %70, %cst_32 {dimension_numbers = #tpu.dot_dimension_numbers<[1], [0], [0], [1], [0, 0, 1, 1], [], []>} : vector<16x16xf32>, vector<16x8xf32>, vector<16x8xf32> -> vector<16x8xf32>
    %86 = vector.extract_strided_slice %31 {offsets = [0, 24], sizes = [16, 8], strides = [1, 1]} : vector<16x96xf32> to vector<16x8xf32>
    %87 = vector.extract_strided_slice %31 {offsets = [0, 56], sizes = [16, 8], strides = [1, 1]} : vector<16x96xf32> to vector<16x8xf32>
    %88 = vector.extract_strided_slice %31 {offsets = [0, 88], sizes = [16, 8], strides = [1, 1]} : vector<16x96xf32> to vector<16x8xf32>
    %cst_33 = arith.constant dense<0.000000e+00> : vector<16x16xf32>
    %89 = tpu.matmul %86, %87, %cst_33 {dimension_numbers = #tpu.dot_dimension_numbers<[1], [1], [0], [0], [0, 0, 1, 0], [], []>} : vector<16x8xf32>, vector<16x8xf32>, vector<16x16xf32> -> vector<16x16xf32>
    %cst_34 = arith.constant 0.353553385 : f32
    %90 = vector.broadcast %cst_34 : f32 to vector<16x16xf32>
    %91 = arith.mulf %89, %90 : vector<16x16xf32>
    %92 = arith.addf %91, %0 : vector<16x16xf32>
    %cst_35 = arith.constant dense<0xFF800000> : vector<16xf32>
    %93 = vector.multi_reduction <maximumf>, %92, %cst_35 [1] : vector<16x16xf32> to vector<16xf32>
    %94 = vector.shape_cast %93 : vector<16xf32> to vector<16x1xf32>
    %95 = vector.broadcast %94 : vector<16x1xf32> to vector<16x16xf32>
    %96 = arith.subf %92, %95 : vector<16x16xf32>
    %97 = math.exp %96 : vector<16x16xf32>
    %cst_36 = arith.constant dense<0.000000e+00> : vector<16xf32>
    %98 = vector.multi_reduction <add>, %97, %cst_36 [1] : vector<16x16xf32> to vector<16xf32>
    %99 = vector.shape_cast %98 : vector<16xf32> to vector<16x1xf32>
    %100 = tpu.reciprocal %99 {approx = true} : vector<16x1xf32> -> vector<16x1xf32>
    %101 = vector.broadcast %100 : vector<16x1xf32> to vector<16x16xf32>
    %102 = arith.mulf %97, %101 : vector<16x16xf32>
    %cst_37 = arith.constant dense<0.000000e+00> : vector<16x8xf32>
    %103 = tpu.matmul %102, %88, %cst_37 {dimension_numbers = #tpu.dot_dimension_numbers<[1], [0], [0], [1], [0, 0, 1, 1], [], []>} : vector<16x16xf32>, vector<16x8xf32>, vector<16x8xf32> -> vector<16x8xf32>
    %104 = tpu.concatenate %49, %67, %85, %103 in 1 : vector<16x8xf32>, vector<16x8xf32>, vector<16x8xf32>, vector<16x8xf32> -> vector<16x32xf32>
    %c0_38 = arith.constant 0 : index
    %c0_39 = arith.constant 0 : index
    %c0_40 = arith.constant 0 : index
    %105 = vector.load %arg6[%c0_38, %c0_39, %c0_40] : memref<2x32x32xbf16, #tpu.memory_space<vmem>>, vector<1x32x32xbf16>
    %106 = vector.shape_cast %105 : vector<1x32x32xbf16> to vector<32x32xbf16>
    %107 = arith.truncf %104 : vector<16x32xf32> to vector<16x32xbf16>
    %cst_41 = arith.constant dense<0.000000e+00> : vector<16x32xf32>
    %108 = tpu.matmul %107, %106, %cst_41 {dimension_numbers = #tpu.dot_dimension_numbers<[1], [0], [0], [1], [0, 0, 1, 1], [], []>} : vector<16x32xbf16>, vector<32x32xbf16>, vector<16x32xf32> -> vector<16x32xf32>
    %c0_42 = arith.constant 0 : index
    %c0_43 = arith.constant 0 : index
    %c0_44 = arith.constant 0 : index
    %109 = vector.load %arg7[%c0_42, %c0_43, %c0_44] : memref<2x1x32xf32, #tpu.memory_space<vmem>>, vector<1x1x32xf32>
    %110 = vector.shape_cast %109 : vector<1x1x32xf32> to vector<1x32xf32>
    %111 = vector.broadcast %110 : vector<1x32xf32> to vector<16x32xf32>
    %112 = arith.addf %108, %111 : vector<16x32xf32>
    %113 = arith.addf %112, %23 : vector<16x32xf32>
    %c0_45 = arith.constant 0 : index
    %c0_46 = arith.constant 0 : index
    %c0_47 = arith.constant 0 : index
    %114 = vector.load %arg8[%c0_45, %c0_46, %c0_47] : memref<2x1x32xf32, #tpu.memory_space<vmem>>, vector<1x1x32xf32>
    %115 = vector.shape_cast %114 : vector<1x1x32xf32> to vector<1x32xf32>
    %c0_48 = arith.constant 0 : index
    %c0_49 = arith.constant 0 : index
    %c0_50 = arith.constant 0 : index
    %116 = vector.load %arg9[%c0_48, %c0_49, %c0_50] : memref<2x1x32xf32, #tpu.memory_space<vmem>>, vector<1x1x32xf32>
    %117 = vector.shape_cast %116 : vector<1x1x32xf32> to vector<1x32xf32>
    %cst_51 = arith.constant dense<0.000000e+00> : vector<16xf32>
    %118 = vector.multi_reduction <add>, %113, %cst_51 [1] : vector<16x32xf32> to vector<16xf32>
    %119 = vector.shape_cast %118 : vector<16xf32> to vector<16x1xf32>
    %cst_52 = arith.constant 3.200000e+01 : f32
    %120 = vector.broadcast %cst_52 : f32 to vector<16x1xf32>
    %121 = arith.divf %119, %120 : vector<16x1xf32>
    %122 = vector.broadcast %121 : vector<16x1xf32> to vector<16x32xf32>
    %123 = arith.subf %113, %122 : vector<16x32xf32>
    %124 = arith.mulf %123, %123 : vector<16x32xf32>
    %cst_53 = arith.constant dense<0.000000e+00> : vector<16xf32>
    %125 = vector.multi_reduction <add>, %124, %cst_53 [1] : vector<16x32xf32> to vector<16xf32>
    %126 = vector.shape_cast %125 : vector<16xf32> to vector<16x1xf32>
    %cst_54 = arith.constant 3.200000e+01 : f32
    %127 = vector.broadcast %cst_54 : f32 to vector<16x1xf32>
    %128 = arith.divf %126, %127 : vector<16x1xf32>
    %cst_55 = arith.constant 9.99999996E-13 : f32
    %129 = vector.broadcast %cst_55 : f32 to vector<16x1xf32>
    %130 = arith.addf %128, %129 : vector<16x1xf32>
    %131 = math.rsqrt %130 : vector<16x1xf32>
    %132 = vector.broadcast %131 : vector<16x1xf32> to vector<16x32xf32>
    %133 = arith.mulf %123, %132 : vector<16x32xf32>
    %134 = vector.broadcast %115 : vector<1x32xf32> to vector<16x32xf32>
    %135 = arith.mulf %133, %134 : vector<16x32xf32>
    %136 = vector.broadcast %117 : vector<1x32xf32> to vector<16x32xf32>
    %137 = arith.addf %135, %136 : vector<16x32xf32>
    %c0_56 = arith.constant 0 : index
    %c0_57 = arith.constant 0 : index
    %c0_58 = arith.constant 0 : index
    %138 = vector.load %arg10[%c0_56, %c0_57, %c0_58] : memref<2x32x128xbf16, #tpu.memory_space<vmem>>, vector<1x32x128xbf16>
    %139 = vector.shape_cast %138 : vector<1x32x128xbf16> to vector<32x128xbf16>
    %140 = arith.truncf %137 : vector<16x32xf32> to vector<16x32xbf16>
    %cst_59 = arith.constant dense<0.000000e+00> : vector<16x128xf32>
    %141 = tpu.matmul %140, %139, %cst_59 {dimension_numbers = #tpu.dot_dimension_numbers<[1], [0], [0], [1], [0, 0, 1, 1], [], []>} : vector<16x32xbf16>, vector<32x128xbf16>, vector<16x128xf32> -> vector<16x128xf32>
    %c0_60 = arith.constant 0 : index
    %c0_61 = arith.constant 0 : index
    %c0_62 = arith.constant 0 : index
    %142 = vector.load %arg11[%c0_60, %c0_61, %c0_62] : memref<2x1x128xf32, #tpu.memory_space<vmem>>, vector<1x1x128xf32>
    %143 = vector.shape_cast %142 : vector<1x1x128xf32> to vector<1x128xf32>
    %144 = vector.broadcast %143 : vector<1x128xf32> to vector<16x128xf32>
    %145 = arith.addf %141, %144 : vector<16x128xf32>
    %cst_63 = arith.constant 5.000000e-01 : f32
    %146 = vector.broadcast %cst_63 : f32 to vector<16x128xf32>
    %147 = arith.mulf %146, %145 : vector<16x128xf32>
    %cst_64 = arith.constant 4.471500e-02 : f32
    %148 = vector.broadcast %cst_64 : f32 to vector<16x128xf32>
    %149 = arith.mulf %148, %145 : vector<16x128xf32>
    %150 = arith.mulf %149, %145 : vector<16x128xf32>
    %151 = arith.mulf %150, %145 : vector<16x128xf32>
    %152 = arith.addf %145, %151 : vector<16x128xf32>
    %cst_65 = arith.constant 0.797884583 : f32
    %153 = vector.broadcast %cst_65 : f32 to vector<16x128xf32>
    %154 = arith.mulf %153, %152 : vector<16x128xf32>
    %155 = math.tanh %154 : vector<16x128xf32>
    %cst_66 = arith.constant 1.000000e+00 : f32
    %156 = vector.broadcast %cst_66 : f32 to vector<16x128xf32>
    %157 = arith.addf %156, %155 : vector<16x128xf32>
    %158 = arith.mulf %147, %157 : vector<16x128xf32>
    %c0_67 = arith.constant 0 : index
    %c0_68 = arith.constant 0 : index
    %c0_69 = arith.constant 0 : index
    %159 = vector.load %arg12[%c0_67, %c0_68, %c0_69] : memref<2x128x32xbf16, #tpu.memory_space<vmem>>, vector<1x128x32xbf16>
    %160 = vector.shape_cast %159 : vector<1x128x32xbf16> to vector<128x32xbf16>
    %161 = arith.truncf %158 : vector<16x128xf32> to vector<16x128xbf16>
    %cst_70 = arith.constant dense<0.000000e+00> : vector<16x32xf32>
    %162 = tpu.matmul %161, %160, %cst_70 {dimension_numbers = #tpu.dot_dimension_numbers<[1], [0], [0], [1], [0, 0, 1, 1], [], []>} : vector<16x128xbf16>, vector<128x32xbf16>, vector<16x32xf32> -> vector<16x32xf32>
    %c0_71 = arith.constant 0 : index
    %c0_72 = arith.constant 0 : index
    %c0_73 = arith.constant 0 : index
    %163 = vector.load %arg13[%c0_71, %c0_72, %c0_73] : memref<2x1x32xf32, #tpu.memory_space<vmem>>, vector<1x1x32xf32>
    %164 = vector.shape_cast %163 : vector<1x1x32xf32> to vector<1x32xf32>
    %165 = vector.broadcast %164 : vector<1x32xf32> to vector<16x32xf32>
    %166 = arith.addf %162, %165 : vector<16x32xf32>
    %167 = arith.addf %166, %137 : vector<16x32xf32>
    %c0_74 = arith.constant 0 : index
    %c0_75 = arith.constant 0 : index
    %c0_76 = arith.constant 0 : index
    %168 = vector.load %arg14[%c0_74, %c0_75, %c0_76] : memref<2x1x32xf32, #tpu.memory_space<vmem>>, vector<1x1x32xf32>
    %169 = vector.shape_cast %168 : vector<1x1x32xf32> to vector<1x32xf32>
    %c0_77 = arith.constant 0 : index
    %c0_78 = arith.constant 0 : index
    %c0_79 = arith.constant 0 : index
    %170 = vector.load %arg15[%c0_77, %c0_78, %c0_79] : memref<2x1x32xf32, #tpu.memory_space<vmem>>, vector<1x1x32xf32>
    %171 = vector.shape_cast %170 : vector<1x1x32xf32> to vector<1x32xf32>
    %cst_80 = arith.constant dense<0.000000e+00> : vector<16xf32>
    %172 = vector.multi_reduction <add>, %167, %cst_80 [1] : vector<16x32xf32> to vector<16xf32>
    %173 = vector.shape_cast %172 : vector<16xf32> to vector<16x1xf32>
    %cst_81 = arith.constant 3.200000e+01 : f32
    %174 = vector.broadcast %cst_81 : f32 to vector<16x1xf32>
    %175 = arith.divf %173, %174 : vector<16x1xf32>
    %176 = vector.broadcast %175 : vector<16x1xf32> to vector<16x32xf32>
    %177 = arith.subf %167, %176 : vector<16x32xf32>
    %178 = arith.mulf %177, %177 : vector<16x32xf32>
    %cst_82 = arith.constant dense<0.000000e+00> : vector<16xf32>
    %179 = vector.multi_reduction <add>, %178, %cst_82 [1] : vector<16x32xf32> to vector<16xf32>
    %180 = vector.shape_cast %179 : vector<16xf32> to vector<16x1xf32>
    %cst_83 = arith.constant 3.200000e+01 : f32
    %181 = vector.broadcast %cst_83 : f32 to vector<16x1xf32>
    %182 = arith.divf %180, %181 : vector<16x1xf32>
    %cst_84 = arith.constant 9.99999996E-13 : f32
    %183 = vector.broadcast %cst_84 : f32 to vector<16x1xf32>
    %184 = arith.addf %182, %183 : vector<16x1xf32>
    %185 = math.rsqrt %184 : vector<16x1xf32>
    %186 = vector.broadcast %185 : vector<16x1xf32> to vector<16x32xf32>
    %187 = arith.mulf %177, %186 : vector<16x32xf32>
    %188 = vector.broadcast %169 : vector<1x32xf32> to vector<16x32xf32>
    %189 = arith.mulf %187, %188 : vector<16x32xf32>
    %190 = vector.broadcast %171 : vector<1x32xf32> to vector<16x32xf32>
    %191 = arith.addf %189, %190 : vector<16x32xf32>
    %c1 = arith.constant 1 : index
    %c0_85 = arith.constant 0 : index
    %c0_86 = arith.constant 0 : index
    %192 = vector.load %arg4[%c1, %c0_85, %c0_86] : memref<2x32x96xbf16, #tpu.memory_space<vmem>>, vector<1x32x96xbf16>
    %193 = vector.shape_cast %192 : vector<1x32x96xbf16> to vector<32x96xbf16>
    %194 = arith.truncf %191 : vector<16x32xf32> to vector<16x32xbf16>
    %cst_87 = arith.constant dense<0.000000e+00> : vector<16x96xf32>
    %195 = tpu.matmul %194, %193, %cst_87 {dimension_numbers = #tpu.dot_dimension_numbers<[1], [0], [0], [1], [0, 0, 1, 1], [], []>} : vector<16x32xbf16>, vector<32x96xbf16>, vector<16x96xf32> -> vector<16x96xf32>
    %c1_88 = arith.constant 1 : index
    %c0_89 = arith.constant 0 : index
    %c0_90 = arith.constant 0 : index
    %196 = vector.load %arg5[%c1_88, %c0_89, %c0_90] : memref<2x1x96xf32, #tpu.memory_space<vmem>>, vector<1x1x96xf32>
    %197 = vector.shape_cast %196 : vector<1x1x96xf32> to vector<1x96xf32>
    %198 = vector.broadcast %197 : vector<1x96xf32> to vector<16x96xf32>
    %199 = arith.addf %195, %198 : vector<16x96xf32>
    %200 = vector.extract_strided_slice %199 {offsets = [0, 0], sizes = [16, 8], strides = [1, 1]} : vector<16x96xf32> to vector<16x8xf32>
    %201 = vector.extract_strided_slice %199 {offsets = [0, 32], sizes = [16, 8], strides = [1, 1]} : vector<16x96xf32> to vector<16x8xf32>
    %202 = vector.extract_strided_slice %199 {offsets = [0, 64], sizes = [16, 8], strides = [1, 1]} : vector<16x96xf32> to vector<16x8xf32>
    %cst_91 = arith.constant dense<0.000000e+00> : vector<16x16xf32>
    %203 = tpu.matmul %200, %201, %cst_91 {dimension_numbers = #tpu.dot_dimension_numbers<[1], [1], [0], [0], [0, 0, 1, 0], [], []>} : vector<16x8xf32>, vector<16x8xf32>, vector<16x16xf32> -> vector<16x16xf32>
    %cst_92 = arith.constant 0.353553385 : f32
    %204 = vector.broadcast %cst_92 : f32 to vector<16x16xf32>
    %205 = arith.mulf %203, %204 : vector<16x16xf32>
    %206 = arith.addf %205, %0 : vector<16x16xf32>
    %cst_93 = arith.constant dense<0xFF800000> : vector<16xf32>
    %207 = vector.multi_reduction <maximumf>, %206, %cst_93 [1] : vector<16x16xf32> to vector<16xf32>
    %208 = vector.shape_cast %207 : vector<16xf32> to vector<16x1xf32>
    %209 = vector.broadcast %208 : vector<16x1xf32> to vector<16x16xf32>
    %210 = arith.subf %206, %209 : vector<16x16xf32>
    %211 = math.exp %210 : vector<16x16xf32>
    %cst_94 = arith.constant dense<0.000000e+00> : vector<16xf32>
    %212 = vector.multi_reduction <add>, %211, %cst_94 [1] : vector<16x16xf32> to vector<16xf32>
    %213 = vector.shape_cast %212 : vector<16xf32> to vector<16x1xf32>
    %214 = tpu.reciprocal %213 {approx = true} : vector<16x1xf32> -> vector<16x1xf32>
    %215 = vector.broadcast %214 : vector<16x1xf32> to vector<16x16xf32>
    %216 = arith.mulf %211, %215 : vector<16x16xf32>
    %cst_95 = arith.constant dense<0.000000e+00> : vector<16x8xf32>
    %217 = tpu.matmul %216, %202, %cst_95 {dimension_numbers = #tpu.dot_dimension_numbers<[1], [0], [0], [1], [0, 0, 1, 1], [], []>} : vector<16x16xf32>, vector<16x8xf32>, vector<16x8xf32> -> vector<16x8xf32>
    %218 = vector.extract_strided_slice %199 {offsets = [0, 8], sizes = [16, 8], strides = [1, 1]} : vector<16x96xf32> to vector<16x8xf32>
    %219 = vector.extract_strided_slice %199 {offsets = [0, 40], sizes = [16, 8], strides = [1, 1]} : vector<16x96xf32> to vector<16x8xf32>
    %220 = vector.extract_strided_slice %199 {offsets = [0, 72], sizes = [16, 8], strides = [1, 1]} : vector<16x96xf32> to vector<16x8xf32>
    %cst_96 = arith.constant dense<0.000000e+00> : vector<16x16xf32>
    %221 = tpu.matmul %218, %219, %cst_96 {dimension_numbers = #tpu.dot_dimension_numbers<[1], [1], [0], [0], [0, 0, 1, 0], [], []>} : vector<16x8xf32>, vector<16x8xf32>, vector<16x16xf32> -> vector<16x16xf32>
    %cst_97 = arith.constant 0.353553385 : f32
    %222 = vector.broadcast %cst_97 : f32 to vector<16x16xf32>
    %223 = arith.mulf %221, %222 : vector<16x16xf32>
    %224 = arith.addf %223, %0 : vector<16x16xf32>
    %cst_98 = arith.constant dense<0xFF800000> : vector<16xf32>
    %225 = vector.multi_reduction <maximumf>, %224, %cst_98 [1] : vector<16x16xf32> to vector<16xf32>
    %226 = vector.shape_cast %225 : vector<16xf32> to vector<16x1xf32>
    %227 = vector.broadcast %226 : vector<16x1xf32> to vector<16x16xf32>
    %228 = arith.subf %224, %227 : vector<16x16xf32>
    %229 = math.exp %228 : vector<16x16xf32>
    %cst_99 = arith.constant dense<0.000000e+00> : vector<16xf32>
    %230 = vector.multi_reduction <add>, %229, %cst_99 [1] : vector<16x16xf32> to vector<16xf32>
    %231 = vector.shape_cast %230 : vector<16xf32> to vector<16x1xf32>
    %232 = tpu.reciprocal %231 {approx = true} : vector<16x1xf32> -> vector<16x1xf32>
    %233 = vector.broadcast %232 : vector<16x1xf32> to vector<16x16xf32>
    %234 = arith.mulf %229, %233 : vector<16x16xf32>
    %cst_100 = arith.constant dense<0.000000e+00> : vector<16x8xf32>
    %235 = tpu.matmul %234, %220, %cst_100 {dimension_numbers = #tpu.dot_dimension_numbers<[1], [0], [0], [1], [0, 0, 1, 1], [], []>} : vector<16x16xf32>, vector<16x8xf32>, vector<16x8xf32> -> vector<16x8xf32>
    %236 = vector.extract_strided_slice %199 {offsets = [0, 16], sizes = [16, 8], strides = [1, 1]} : vector<16x96xf32> to vector<16x8xf32>
    %237 = vector.extract_strided_slice %199 {offsets = [0, 48], sizes = [16, 8], strides = [1, 1]} : vector<16x96xf32> to vector<16x8xf32>
    %238 = vector.extract_strided_slice %199 {offsets = [0, 80], sizes = [16, 8], strides = [1, 1]} : vector<16x96xf32> to vector<16x8xf32>
    %cst_101 = arith.constant dense<0.000000e+00> : vector<16x16xf32>
    %239 = tpu.matmul %236, %237, %cst_101 {dimension_numbers = #tpu.dot_dimension_numbers<[1], [1], [0], [0], [0, 0, 1, 0], [], []>} : vector<16x8xf32>, vector<16x8xf32>, vector<16x16xf32> -> vector<16x16xf32>
    %cst_102 = arith.constant 0.353553385 : f32
    %240 = vector.broadcast %cst_102 : f32 to vector<16x16xf32>
    %241 = arith.mulf %239, %240 : vector<16x16xf32>
    %242 = arith.addf %241, %0 : vector<16x16xf32>
    %cst_103 = arith.constant dense<0xFF800000> : vector<16xf32>
    %243 = vector.multi_reduction <maximumf>, %242, %cst_103 [1] : vector<16x16xf32> to vector<16xf32>
    %244 = vector.shape_cast %243 : vector<16xf32> to vector<16x1xf32>
    %245 = vector.broadcast %244 : vector<16x1xf32> to vector<16x16xf32>
    %246 = arith.subf %242, %245 : vector<16x16xf32>
    %247 = math.exp %246 : vector<16x16xf32>
    %cst_104 = arith.constant dense<0.000000e+00> : vector<16xf32>
    %248 = vector.multi_reduction <add>, %247, %cst_104 [1] : vector<16x16xf32> to vector<16xf32>
    %249 = vector.shape_cast %248 : vector<16xf32> to vector<16x1xf32>
    %250 = tpu.reciprocal %249 {approx = true} : vector<16x1xf32> -> vector<16x1xf32>
    %251 = vector.broadcast %250 : vector<16x1xf32> to vector<16x16xf32>
    %252 = arith.mulf %247, %251 : vector<16x16xf32>
    %cst_105 = arith.constant dense<0.000000e+00> : vector<16x8xf32>
    %253 = tpu.matmul %252, %238, %cst_105 {dimension_numbers = #tpu.dot_dimension_numbers<[1], [0], [0], [1], [0, 0, 1, 1], [], []>} : vector<16x16xf32>, vector<16x8xf32>, vector<16x8xf32> -> vector<16x8xf32>
    %254 = vector.extract_strided_slice %199 {offsets = [0, 24], sizes = [16, 8], strides = [1, 1]} : vector<16x96xf32> to vector<16x8xf32>
    %255 = vector.extract_strided_slice %199 {offsets = [0, 56], sizes = [16, 8], strides = [1, 1]} : vector<16x96xf32> to vector<16x8xf32>
    %256 = vector.extract_strided_slice %199 {offsets = [0, 88], sizes = [16, 8], strides = [1, 1]} : vector<16x96xf32> to vector<16x8xf32>
    %cst_106 = arith.constant dense<0.000000e+00> : vector<16x16xf32>
    %257 = tpu.matmul %254, %255, %cst_106 {dimension_numbers = #tpu.dot_dimension_numbers<[1], [1], [0], [0], [0, 0, 1, 0], [], []>} : vector<16x8xf32>, vector<16x8xf32>, vector<16x16xf32> -> vector<16x16xf32>
    %cst_107 = arith.constant 0.353553385 : f32
    %258 = vector.broadcast %cst_107 : f32 to vector<16x16xf32>
    %259 = arith.mulf %257, %258 : vector<16x16xf32>
    %260 = arith.addf %259, %0 : vector<16x16xf32>
    %cst_108 = arith.constant dense<0xFF800000> : vector<16xf32>
    %261 = vector.multi_reduction <maximumf>, %260, %cst_108 [1] : vector<16x16xf32> to vector<16xf32>
    %262 = vector.shape_cast %261 : vector<16xf32> to vector<16x1xf32>
    %263 = vector.broadcast %262 : vector<16x1xf32> to vector<16x16xf32>
    %264 = arith.subf %260, %263 : vector<16x16xf32>
    %265 = math.exp %264 : vector<16x16xf32>
    %cst_109 = arith.constant dense<0.000000e+00> : vector<16xf32>
    %266 = vector.multi_reduction <add>, %265, %cst_109 [1] : vector<16x16xf32> to vector<16xf32>
    %267 = vector.shape_cast %266 : vector<16xf32> to vector<16x1xf32>
    %268 = tpu.reciprocal %267 {approx = true} : vector<16x1xf32> -> vector<16x1xf32>
    %269 = vector.broadcast %268 : vector<16x1xf32> to vector<16x16xf32>
    %270 = arith.mulf %265, %269 : vector<16x16xf32>
    %cst_110 = arith.constant dense<0.000000e+00> : vector<16x8xf32>
    %271 = tpu.matmul %270, %256, %cst_110 {dimension_numbers = #tpu.dot_dimension_numbers<[1], [0], [0], [1], [0, 0, 1, 1], [], []>} : vector<16x16xf32>, vector<16x8xf32>, vector<16x8xf32> -> vector<16x8xf32>
    %272 = tpu.concatenate %217, %235, %253, %271 in 1 : vector<16x8xf32>, vector<16x8xf32>, vector<16x8xf32>, vector<16x8xf32> -> vector<16x32xf32>
    %c1_111 = arith.constant 1 : index
    %c0_112 = arith.constant 0 : index
    %c0_113 = arith.constant 0 : index
    %273 = vector.load %arg6[%c1_111, %c0_112, %c0_113] : memref<2x32x32xbf16, #tpu.memory_space<vmem>>, vector<1x32x32xbf16>
    %274 = vector.shape_cast %273 : vector<1x32x32xbf16> to vector<32x32xbf16>
    %275 = arith.truncf %272 : vector<16x32xf32> to vector<16x32xbf16>
    %cst_114 = arith.constant dense<0.000000e+00> : vector<16x32xf32>
    %276 = tpu.matmul %275, %274, %cst_114 {dimension_numbers = #tpu.dot_dimension_numbers<[1], [0], [0], [1], [0, 0, 1, 1], [], []>} : vector<16x32xbf16>, vector<32x32xbf16>, vector<16x32xf32> -> vector<16x32xf32>
    %c1_115 = arith.constant 1 : index
    %c0_116 = arith.constant 0 : index
    %c0_117 = arith.constant 0 : index
    %277 = vector.load %arg7[%c1_115, %c0_116, %c0_117] : memref<2x1x32xf32, #tpu.memory_space<vmem>>, vector<1x1x32xf32>
    %278 = vector.shape_cast %277 : vector<1x1x32xf32> to vector<1x32xf32>
    %279 = vector.broadcast %278 : vector<1x32xf32> to vector<16x32xf32>
    %280 = arith.addf %276, %279 : vector<16x32xf32>
    %281 = arith.addf %280, %191 : vector<16x32xf32>
    %c1_118 = arith.constant 1 : index
    %c0_119 = arith.constant 0 : index
    %c0_120 = arith.constant 0 : index
    %282 = vector.load %arg8[%c1_118, %c0_119, %c0_120] : memref<2x1x32xf32, #tpu.memory_space<vmem>>, vector<1x1x32xf32>
    %283 = vector.shape_cast %282 : vector<1x1x32xf32> to vector<1x32xf32>
    %c1_121 = arith.constant 1 : index
    %c0_122 = arith.constant 0 : index
    %c0_123 = arith.constant 0 : index
    %284 = vector.load %arg9[%c1_121, %c0_122, %c0_123] : memref<2x1x32xf32, #tpu.memory_space<vmem>>, vector<1x1x32xf32>
    %285 = vector.shape_cast %284 : vector<1x1x32xf32> to vector<1x32xf32>
    %cst_124 = arith.constant dense<0.000000e+00> : vector<16xf32>
    %286 = vector.multi_reduction <add>, %281, %cst_124 [1] : vector<16x32xf32> to vector<16xf32>
    %287 = vector.shape_cast %286 : vector<16xf32> to vector<16x1xf32>
    %cst_125 = arith.constant 3.200000e+01 : f32
    %288 = vector.broadcast %cst_125 : f32 to vector<16x1xf32>
    %289 = arith.divf %287, %288 : vector<16x1xf32>
    %290 = vector.broadcast %289 : vector<16x1xf32> to vector<16x32xf32>
    %291 = arith.subf %281, %290 : vector<16x32xf32>
    %292 = arith.mulf %291, %291 : vector<16x32xf32>
    %cst_126 = arith.constant dense<0.000000e+00> : vector<16xf32>
    %293 = vector.multi_reduction <add>, %292, %cst_126 [1] : vector<16x32xf32> to vector<16xf32>
    %294 = vector.shape_cast %293 : vector<16xf32> to vector<16x1xf32>
    %cst_127 = arith.constant 3.200000e+01 : f32
    %295 = vector.broadcast %cst_127 : f32 to vector<16x1xf32>
    %296 = arith.divf %294, %295 : vector<16x1xf32>
    %cst_128 = arith.constant 9.99999996E-13 : f32
    %297 = vector.broadcast %cst_128 : f32 to vector<16x1xf32>
    %298 = arith.addf %296, %297 : vector<16x1xf32>
    %299 = math.rsqrt %298 : vector<16x1xf32>
    %300 = vector.broadcast %299 : vector<16x1xf32> to vector<16x32xf32>
    %301 = arith.mulf %291, %300 : vector<16x32xf32>
    %302 = vector.broadcast %283 : vector<1x32xf32> to vector<16x32xf32>
    %303 = arith.mulf %301, %302 : vector<16x32xf32>
    %304 = vector.broadcast %285 : vector<1x32xf32> to vector<16x32xf32>
    %305 = arith.addf %303, %304 : vector<16x32xf32>
    %c1_129 = arith.constant 1 : index
    %c0_130 = arith.constant 0 : index
    %c0_131 = arith.constant 0 : index
    %306 = vector.load %arg10[%c1_129, %c0_130, %c0_131] : memref<2x32x128xbf16, #tpu.memory_space<vmem>>, vector<1x32x128xbf16>
    %307 = vector.shape_cast %306 : vector<1x32x128xbf16> to vector<32x128xbf16>
    %308 = arith.truncf %305 : vector<16x32xf32> to vector<16x32xbf16>
    %cst_132 = arith.constant dense<0.000000e+00> : vector<16x128xf32>
    %309 = tpu.matmul %308, %307, %cst_132 {dimension_numbers = #tpu.dot_dimension_numbers<[1], [0], [0], [1], [0, 0, 1, 1], [], []>} : vector<16x32xbf16>, vector<32x128xbf16>, vector<16x128xf32> -> vector<16x128xf32>
    %c1_133 = arith.constant 1 : index
    %c0_134 = arith.constant 0 : index
    %c0_135 = arith.constant 0 : index
    %310 = vector.load %arg11[%c1_133, %c0_134, %c0_135] : memref<2x1x128xf32, #tpu.memory_space<vmem>>, vector<1x1x128xf32>
    %311 = vector.shape_cast %310 : vector<1x1x128xf32> to vector<1x128xf32>
    %312 = vector.broadcast %311 : vector<1x128xf32> to vector<16x128xf32>
    %313 = arith.addf %309, %312 : vector<16x128xf32>
    %cst_136 = arith.constant 5.000000e-01 : f32
    %314 = vector.broadcast %cst_136 : f32 to vector<16x128xf32>
    %315 = arith.mulf %314, %313 : vector<16x128xf32>
    %cst_137 = arith.constant 4.471500e-02 : f32
    %316 = vector.broadcast %cst_137 : f32 to vector<16x128xf32>
    %317 = arith.mulf %316, %313 : vector<16x128xf32>
    %318 = arith.mulf %317, %313 : vector<16x128xf32>
    %319 = arith.mulf %318, %313 : vector<16x128xf32>
    %320 = arith.addf %313, %319 : vector<16x128xf32>
    %cst_138 = arith.constant 0.797884583 : f32
    %321 = vector.broadcast %cst_138 : f32 to vector<16x128xf32>
    %322 = arith.mulf %321, %320 : vector<16x128xf32>
    %323 = math.tanh %322 : vector<16x128xf32>
    %cst_139 = arith.constant 1.000000e+00 : f32
    %324 = vector.broadcast %cst_139 : f32 to vector<16x128xf32>
    %325 = arith.addf %324, %323 : vector<16x128xf32>
    %326 = arith.mulf %315, %325 : vector<16x128xf32>
    %c1_140 = arith.constant 1 : index
    %c0_141 = arith.constant 0 : index
    %c0_142 = arith.constant 0 : index
    %327 = vector.load %arg12[%c1_140, %c0_141, %c0_142] : memref<2x128x32xbf16, #tpu.memory_space<vmem>>, vector<1x128x32xbf16>
    %328 = vector.shape_cast %327 : vector<1x128x32xbf16> to vector<128x32xbf16>
    %329 = arith.truncf %326 : vector<16x128xf32> to vector<16x128xbf16>
    %cst_143 = arith.constant dense<0.000000e+00> : vector<16x32xf32>
    %330 = tpu.matmul %329, %328, %cst_143 {dimension_numbers = #tpu.dot_dimension_numbers<[1], [0], [0], [1], [0, 0, 1, 1], [], []>} : vector<16x128xbf16>, vector<128x32xbf16>, vector<16x32xf32> -> vector<16x32xf32>
    %c1_144 = arith.constant 1 : index
    %c0_145 = arith.constant 0 : index
    %c0_146 = arith.constant 0 : index
    %331 = vector.load %arg13[%c1_144, %c0_145, %c0_146] : memref<2x1x32xf32, #tpu.memory_space<vmem>>, vector<1x1x32xf32>
    %332 = vector.shape_cast %331 : vector<1x1x32xf32> to vector<1x32xf32>
    %333 = vector.broadcast %332 : vector<1x32xf32> to vector<16x32xf32>
    %334 = arith.addf %330, %333 : vector<16x32xf32>
    %335 = arith.addf %334, %305 : vector<16x32xf32>
    %c1_147 = arith.constant 1 : index
    %c0_148 = arith.constant 0 : index
    %c0_149 = arith.constant 0 : index
    %336 = vector.load %arg14[%c1_147, %c0_148, %c0_149] : memref<2x1x32xf32, #tpu.memory_space<vmem>>, vector<1x1x32xf32>
    %337 = vector.shape_cast %336 : vector<1x1x32xf32> to vector<1x32xf32>
    %c1_150 = arith.constant 1 : index
    %c0_151 = arith.constant 0 : index
    %c0_152 = arith.constant 0 : index
    %338 = vector.load %arg15[%c1_150, %c0_151, %c0_152] : memref<2x1x32xf32, #tpu.memory_space<vmem>>, vector<1x1x32xf32>
    %339 = vector.shape_cast %338 : vector<1x1x32xf32> to vector<1x32xf32>
    %cst_153 = arith.constant dense<0.000000e+00> : vector<16xf32>
    %340 = vector.multi_reduction <add>, %335, %cst_153 [1] : vector<16x32xf32> to vector<16xf32>
    %341 = vector.shape_cast %340 : vector<16xf32> to vector<16x1xf32>
    %cst_154 = arith.constant 3.200000e+01 : f32
    %342 = vector.broadcast %cst_154 : f32 to vector<16x1xf32>
    %343 = arith.divf %341, %342 : vector<16x1xf32>
    %344 = vector.broadcast %343 : vector<16x1xf32> to vector<16x32xf32>
    %345 = arith.subf %335, %344 : vector<16x32xf32>
    %346 = arith.mulf %345, %345 : vector<16x32xf32>
    %cst_155 = arith.constant dense<0.000000e+00> : vector<16xf32>
    %347 = vector.multi_reduction <add>, %346, %cst_155 [1] : vector<16x32xf32> to vector<16xf32>
    %348 = vector.shape_cast %347 : vector<16xf32> to vector<16x1xf32>
    %cst_156 = arith.constant 3.200000e+01 : f32
    %349 = vector.broadcast %cst_156 : f32 to vector<16x1xf32>
    %350 = arith.divf %348, %349 : vector<16x1xf32>
    %cst_157 = arith.constant 9.99999996E-13 : f32
    %351 = vector.broadcast %cst_157 : f32 to vector<16x1xf32>
    %352 = arith.addf %350, %351 : vector<16x1xf32>
    %353 = math.rsqrt %352 : vector<16x1xf32>
    %354 = vector.broadcast %353 : vector<16x1xf32> to vector<16x32xf32>
    %355 = arith.mulf %345, %354 : vector<16x32xf32>
    %356 = vector.broadcast %337 : vector<1x32xf32> to vector<16x32xf32>
    %357 = arith.mulf %355, %356 : vector<16x32xf32>
    %358 = vector.broadcast %339 : vector<1x32xf32> to vector<16x32xf32>
    %359 = arith.addf %357, %358 : vector<16x32xf32>
    %c0_158 = arith.constant 0 : index
    %c0_159 = arith.constant 0 : index
    %360 = vector.load %arg16[%c0_158, %c0_159] : memref<32x128xf32, #tpu.memory_space<vmem>>, vector<32x128xf32>
    %cst_160 = arith.constant dense<0.000000e+00> : vector<16x128xf32>
    %361 = tpu.matmul %359, %360, %cst_160 {dimension_numbers = #tpu.dot_dimension_numbers<[1], [0], [0], [1], [0, 0, 1, 1], [], []>} : vector<16x32xf32>, vector<32x128xf32>, vector<16x128xf32> -> vector<16x128xf32>
    %c0_161 = arith.constant 0 : index
    %c0_162 = arith.constant 0 : index
    %362 = vector.load %arg17[%c0_161, %c0_162] : memref<1x128xf32, #tpu.memory_space<vmem>>, vector<1x128xf32>
    %363 = vector.broadcast %362 : vector<1x128xf32> to vector<16x128xf32>
    %364 = arith.addf %361, %363 : vector<16x128xf32>
    %c0_163 = arith.constant 0 : index
    %c0_164 = arith.constant 0 : index
    %365 = vector.load %arg18[%c0_163, %c0_164] : memref<16x128xf32, #tpu.memory_space<vmem>>, vector<16x128xf32>
    tpu.vector_store %arg18[%c0_163, %c0_164], %364 {strides = array<i32>} : memref<16x128xf32, #tpu.memory_space<vmem>>, vector<16x128xf32>,
    return
  }
}

</mosaic_0001>

<llo_original>
// kernel: model_forward.1
$region0: #{model_forward.1}
  #allocation0 [shape = 'u32[]', space=smem, size = 0x4, offset = 0x4, fixed_abs, tag = 'smem constant byte address 0x4 - core index']
  #allocation1 [shape = 'u32[72,128]{1,0:T(1,128)}', space=vmem, size = 0x9000, scoped, tag = 'internal scratch']
  %s0 = inlined_call_operand.vmem [shape: f32[16,32], index: 0, kind: input, shape index: {}]
  %s1 = inlined_call_operand.vmem [shape: f32[16,16], index: 1, kind: input, shape index: {}]
  %s2 = inlined_call_operand.vmem [shape: f32[1,32], index: 2, kind: input, shape index: {}]
  %s3 = inlined_call_operand.vmem [shape: f32[1,32], index: 3, kind: input, shape index: {}]
  %s4 = inlined_call_operand.vmem [shape: bf16[2,32,96], index: 4, kind: input, shape index: {}]
  %s5 = inlined_call_operand.vmem [shape: f32[2,1,96], index: 5, kind: input, shape index: {}]
  %s6 = inlined_call_operand.vmem [shape: bf16[2,32,32], index: 6, kind: input, shape index: {}]
  %s7 = inlined_call_operand.vmem [shape: f32[2,1,32], index: 7, kind: input, shape index: {}]
  %s8 = inlined_call_operand.vmem [shape: f32[2,1,32], index: 8, kind: input, shape index: {}]
  %s9 = inlined_call_operand.vmem [shape: f32[2,1,32], index: 9, kind: input, shape index: {}]
  %s10 = inlined_call_operand.vmem [shape: bf16[2,32,128], index: 10, kind: input, shape index: {}]
  %s11 = inlined_call_operand.vmem [shape: f32[2,1,128], index: 11, kind: input, shape index: {}]
  %s12 = inlined_call_operand.vmem [shape: bf16[2,128,32], index: 12, kind: input, shape index: {}]
  %s13 = inlined_call_operand.vmem [shape: f32[2,1,32], index: 13, kind: input, shape index: {}]
  %s14 = inlined_call_operand.vmem [shape: f32[2,1,32], index: 14, kind: input, shape index: {}]
  %s15 = inlined_call_operand.vmem [shape: f32[2,1,32], index: 15, kind: input, shape index: {}]
  %s16 = inlined_call_operand.vmem [shape: f32[32,128], index: 16, kind: input, shape index: {}]
  %s17 = inlined_call_operand.vmem [shape: f32[1,128], index: 17, kind: input, shape index: {}]
  %s18 = inlined_call_operand.vmem [shape: f32[16,128], index: 18, kind: output, shape index: {}]
  %s19 = sld [smem:[#allocation0]]
  $region82: #{model_forward.1} parent=0
    _
  %s21 = ssub.s32 1, %s19
  %s22 = scalar_select 0, %s21, %s19
  // Predicated region
  $region2: #{model_forward.1} parent=0 // pred_check
    _
  $region3: #{model_forward.1} parent=0 // pred_check_branch
    %24 = sbr.rel (0) target = $region5
  $region4: #{model_forward.1} parent=0 // pred_region
    _
  $region5: #{model_forward.1} parent=0 // pred_fallthru
    _
  // Predicated region
  $region6: #{model_forward.1} parent=0 // pred_check
    _
  $region7: #{model_forward.1} parent=0 // pred_check_branch
    %26 = sbr.rel (0) target = $region9
  $region8: #{model_forward.1} parent=0 // pred_region
    _
  $region9: #{model_forward.1} parent=0 // pred_fallthru
    _
  // Predicated region
  $region10: #{model_forward.1} parent=0 // pred_check
    _
  $region11: #{model_forward.1} parent=0 // pred_check_branch
    %28 = sbr.rel (0) target = $region13
  $region12: #{model_forward.1} parent=0 // pred_region
    _
  $region13: #{model_forward.1} parent=0 // pred_fallthru
    _
  // Predicated region
  $region14: #{model_forward.1} parent=0 // pred_check
    _
  $region15: #{model_forward.1} parent=0 // pred_check_branch
    %30 = sbr.rel (0) target = $region17
  $region16: #{model_forward.1} parent=0 // pred_region
    _
  $region17: #{model_forward.1} parent=0 // pred_fallthru
    _
  // Predicated region
  $region18: #{model_forward.1} parent=0 // pred_check
    _
  $region19: #{model_forward.1} parent=0 // pred_check_branch
    %32 = sbr.rel (0) target = $region21
  $region20: #{model_forward.1} parent=0 // pred_region
    _
  $region21: #{model_forward.1} parent=0 // pred_fallthru
    _
  // Predicated region
  $region22: #{model_forward.1} parent=0 // pred_check
    _
  $region23: #{model_forward.1} parent=0 // pred_check_branch
    %34 = sbr.rel (0) target = $region25
  $region24: #{model_forward.1} parent=0 // pred_region
    _
  $region25: #{model_forward.1} parent=0 // pred_fallthru
    _
  // Predicated region
  $region26: #{model_forward.1} parent=0 // pred_check
    _
  $region27: #{model_forward.1} parent=0 // pred_check_branch
    %36 = sbr.rel (0) target = $region29
  $region28: #{model_forward.1} parent=0 // pred_region
    _
  $region29: #{model_forward.1} parent=0 // pred_fallthru
    _
  // Predicated region
  $region30: #{model_forward.1} parent=0 // pred_check
    _
  $region31: #{model_forward.1} parent=0 // pred_check_branch
    %38 = sbr.rel (0) target = $region33
  $region32: #{model_forward.1} parent=0 // pred_region
    _
  $region33: #{model_forward.1} parent=0 // pred_fallthru
    _
  // Predicated region
  $region34: #{model_forward.1} parent=0 // pred_check
    _
  $region35: #{model_forward.1} parent=0 // pred_check_branch
    %40 = sbr.rel (0) target = $region37
  $region36: #{model_forward.1} parent=0 // pred_region
    _
  $region37: #{model_forward.1} parent=0 // pred_fallthru
    _
  // Predicated region
  $region38: #{model_forward.1} parent=0 // pred_check
    _
  $region39: #{model_forward.1} parent=0 // pred_check_branch
    %42 = sbr.rel (0) target = $region41
  $region40: #{model_forward.1} parent=0 // pred_region
    _
  $region41: #{model_forward.1} parent=0 // pred_fallthru
    _
  // Predicated region
  $region42: #{model_forward.1} parent=0 // pred_check
    _
  $region43: #{model_forward.1} parent=0 // pred_check_branch
    %44 = sbr.rel (0) target = $region45
  $region44: #{model_forward.1} parent=0 // pred_region
    _
  $region45: #{model_forward.1} parent=0 // pred_fallthru
    _
  // Predicated region
  $region46: #{model_forward.1} parent=0 // pred_check
    _
  $region47: #{model_forward.1} parent=0 // pred_check_branch
    %46 = sbr.rel (0) target = $region49
  $region48: #{model_forward.1} parent=0 // pred_region
    _
  $region49: #{model_forward.1} parent=0 // pred_fallthru
    _
  // Predicated region
  $region50: #{model_forward.1} parent=0 // pred_check
    _
  $region51: #{model_forward.1} parent=0 // pred_check_branch
    %48 = sbr.rel (0) target = $region53
  $region52: #{model_forward.1} parent=0 // pred_region
    _
  $region53: #{model_forward.1} parent=0 // pred_fallthru
    _
  // Predicated region
  $region54: #{model_forward.1} parent=0 // pred_check
    _
  $region55: #{model_forward.1} parent=0 // pred_check_branch
    %50 = sbr.rel (0) target = $region57
  $region56: #{model_forward.1} parent=0 // pred_region
    _
  $region57: #{model_forward.1} parent=0 // pred_fallthru
    _
  // Predicated region
  $region58: #{model_forward.1} parent=0 // pred_check
    _
  $region59: #{model_forward.1} parent=0 // pred_check_branch
    %52 = sbr.rel (0) target = $region61
  $region60: #{model_forward.1} parent=0 // pred_region
    _
  $region61: #{model_forward.1} parent=0 // pred_fallthru
    _
  // Predicated region
  $region62: #{model_forward.1} parent=0 // pred_check
    _
  $region63: #{model_forward.1} parent=0 // pred_check_branch
    %54 = sbr.rel (0) target = $region65
  $region64: #{model_forward.1} parent=0 // pred_region
    _
  $region65: #{model_forward.1} parent=0 // pred_fallthru
    _
  // Predicated region
  $region66: #{model_forward.1} parent=0 // pred_check
    _
  $region67: #{model_forward.1} parent=0 // pred_check_branch
    %56 = sbr.rel (0) target = $region69
  $region68: #{model_forward.1} parent=0 // pred_region
    _
  $region69: #{model_forward.1} parent=0 // pred_fallthru
    _
  // Predicated region
  $region70: #{model_forward.1} parent=0 // pred_check
    _
  $region71: #{model_forward.1} parent=0 // pred_check_branch
    %58 = sbr.rel (0) target = $region73
  $region72: #{model_forward.1} parent=0 // pred_region
    _
  $region73: #{model_forward.1} parent=0 // pred_fallthru
    _
  %v60 = vld [vmem:[%s1] sm:$0xff]
  %v61 = vld [vmem:[%s1 + $0x8] sm:$0xff]
  %v62 = vld [vmem:[%s0] sm:$0xff]
  %v63 = vld [vmem:[%s0 + $0x8] sm:$0xff]
  %v64 = vld [vmem:[%s2] sm:$0x1]
  %v65 = vld [vmem:[%s3] sm:$0x1]
  %vm66 = vcmask 261120
  %v67 = vsel %vm66, %v62, 0.0
  %68 = vadd.xlane.f32.xlu0 %v67
  %v69 = vpop.xlane.xlu0 %68
  %v70 = vsel %vm66, %v63, 0.0
  %71 = vadd.xlane.f32.xlu0 %v70
  %v72 = vpop.xlane.xlu0 %71
  %v73 = vrcp.pop 32.0
  %v74 = vmul.f32 32.0, %v73
  %v75 = vsub.f32 1.0, %v74
  %v76 = vmul.f32 %v73, %v75
  %v77 = vadd.f32 %v73, %v76
  %vm78 = vweird.f32 %v73
  %v79 = vsel %vm78, %v73, %v77
  %v80 = vmul.f32 %v69, %v79
  %v81 = vmul.f32 %v72, %v79
  %v82 = vsub.f32 %v62, %v80
  %v83 = vsub.f32 %v63, %v81
  %v84 = vmul.f32 %v82, %v82
  %v85 = vmul.f32 %v83, %v83
  %v86 = vsel %vm66, %v84, 0.0
  %87 = vadd.xlane.f32.xlu0 %v86
  %v88 = vpop.xlane.xlu0 %87
  %v89 = vsel %vm66, %v85, 0.0
  %90 = vadd.xlane.f32.xlu0 %v89
  %v91 = vpop.xlane.xlu0 %90
  %v92 = vmul.f32 %v88, %v79
  %v93 = vmul.f32 %v91, %v79
  %v94 = vadd.f32 %v92, 1e-12
  %v95 = vadd.f32 %v93, 1e-12
  %v96 = vrsqrt.pop %v94
  %v97 = vmul.f32 %v96, %v94
  %v98 = vmul.f32 %v97, %v96
  %v99 = vmul.f32 0.5, %v98
  %v100 = vsub.f32 1.5, %v99
  %v101 = vmul.f32 %v96, %v100
  %vm102 = vweird.f32 %v94
  %vm103 = vweird.f32 %v96
  %vm104 = vmor %vm102, %vm103
  %v105 = vsel %vm104, %v96, %v101
  %v106 = vrsqrt.pop %v95
  %v107 = vmul.f32 %v106, %v95
  %v108 = vmul.f32 %v107, %v106
  %v109 = vmul.f32 0.5, %v108
  %v110 = vsub.f32 1.5, %v109
  %v111 = vmul.f32 %v106, %v110
  %vm112 = vweird.f32 %v95
  %vm113 = vweird.f32 %v106
  %vm114 = vmor %vm112, %vm113
  %v115 = vsel %vm114, %v106, %v111
  %v116 = vmul.f32 %v82, %v105
  %v117 = vmul.f32 %v83, %v115
  %v119 = vperm.slane %v64, 0
  %v121 = vmul.f32 %v116, %v119
  %v122 = vmul.f32 %v117, %v119
  %v124 = vperm.slane %v65, 0
  %v126 = vadd.f32 %v121, %v124
  %v127 = vadd.f32 %v122, %v124
  %v128 = vld [vmem:[%s4] sm:$0xf]
  %v129 = vld [vmem:[%s4 + $0x4] sm:$0xf]
  %v130 = vld [vmem:[%s4 + $0x8] sm:$0xf]
  %v131 = vld [vmem:[%s4 + $0xc] sm:$0xf]
  %v132 = vpack.c.bf16 %v127, %v126
  %v133 = vld [vmem:[%s5] sm:$0x1]
  %v135 = vperm.slane %v133, 0
  %v141 = vunpack.c.l.b16 %v128
  %v142 = vunpack.c.l.b16 %v129
  %v143 = vunpack.c.l.b16 %v130
  %v144 = vunpack.c.l.b16 %v131
  %v145 = vpack.c.b16 %v142, %v141
  %v146 = vpack.c.b16 %v144, %v143
  %v150 = vsel %vm66, %v132, 0
  %152 = vmatpush.bf16.msra.mxu0 0
  %153 = vmatpush.bf16.msra.mxu0 0
  %154 = vmatpush.bf16.msra.mxu0 0
  %155 = vmatpush.bf16.msra.mxu0 0
  %156 = vmatpush.bf16.msra.mxu0 0
  %157 = vmatpush.bf16.msra.mxu0 0
  %158 = vmatpush.bf16.msra.mxu0 %v146
  %159 = vmatpush.bf16.msra.mxu0 %v145
  %160 = vmatmul.bf16.gmra.mxu0 %v150
  %v161 = vpop.f32.mrf.mxu0
  %v162 = vadd.f32 %v135, %v161
  %v163 = vpop.f32.mrf.mxu0
  %v164 = vadd.f32 %v135, %v163
  %165 = vdwg.mxu0
  %168 = vrot.lane.b32.xlu0 %v162, 96
  %v169 = vpop.permute.xlu0 %168
  %170 = vrot.lane.b32.xlu0 %v164, 96
  %v171 = vpop.permute.xlu0 %170
  %vm172 = vcmask 64512
  %v173 = vsel %vm172, %v162, 0
  %v175 = vsel %vm172, %v164, 0
  %v177 = vsel %vm172, %v169, 0
  %v179 = vsel %vm172, %v171, 0
  %181 = vmatpush.xpose.msra.mxu0 0.0
  %182 = vmatpush.xpose.msra.mxu0 0.0
  %183 = vmatpush.xpose.msra.mxu0 0.0
  %184 = vmatpush.xpose.msra.mxu0 0.0
  %185 = vmatpush.xpose.msra.mxu0 0.0
  %186 = vmatpush.xpose.msra.mxu0 0.0
  %187 = vmatpush.xpose.msra.mxu0 0.0
  %188 = vmatpush.xpose.msra.mxu0 0.0
  %189 = vmatpush.xpose.msra.mxu0 0.0
  %190 = vmatpush.xpose.msra.mxu0 0.0
  %191 = vmatpush.xpose.msra.mxu0 0.0
  %192 = vmatpush.xpose.msra.mxu0 0.0
  %193 = vmatpush.xpose.msra.mxu0 0.0
  %194 = vmatpush.xpose.msra.mxu0 0.0
  %195 = vmatpush.xpose.msra.mxu0 %v179
  %196 = vmatpush.xpose.msra.mxu0 %v177
  %197 = vmatmul.f32.gmra.mxu0 %v173
  %v198 = vpop.f32.mrf.mxu0
  %v199 = vadd.f32 0.0, %v198
  %200 = vmatmul.f32.gmra.mxu0 %v175
  %v201 = vpop.f32.mrf.mxu0
  %v202 = vadd.f32 0.0, %v201
  %203 = vdwg.mxu0
  %v204 = vmul.f32 %v199, 0.35355338
  %v205 = vmul.f32 %v202, 0.35355338
  %v206 = vadd.f32 %v204, %v60
  %v207 = vadd.f32 %v205, %v61
  %vm208 = vcmask 130048
  %v209 = vsel %vm208, %v206, -inf
  %210 = vmax.xlane.f32.xlu0 %v209
  %v211 = vpop.xlane.xlu0 %210
  %v212 = vsel %vm208, %v207, -inf
  %213 = vmax.xlane.f32.xlu0 %v212
  %v214 = vpop.xlane.xlu0 %213
  %v215 = vsub.f32 %v206, %v211
  %v216 = vsub.f32 %v207, %v214
  %v217 = vmul.f32 %v215, 1.442695
  %v218 = vpow.pop %v217
  %v219 = vmul.f32 %v216, 1.442695
  %v220 = vpow.pop %v219
  %v221 = vsel %vm208, %v218, 0.0
  %222 = vadd.xlane.f32.xlu0 %v221
  %v223 = vpop.xlane.xlu0 %222
  %v224 = vsel %vm208, %v220, 0.0
  %225 = vadd.xlane.f32.xlu0 %v224
  %v226 = vpop.xlane.xlu0 %225
  %v227 = vrcp.pop %v223
  %v228 = vrcp.pop %v226
  %v229 = vmul.f32 %v218, %v227
  %v230 = vmul.f32 %v220, %v228
  %231 = vrot.lane.b32.xlu0 %v162, 64
  %v232 = vpop.permute.xlu0 %231
  %233 = vrot.lane.b32.xlu0 %v164, 64
  %v234 = vpop.permute.xlu0 %233
  %v238 = vsel %vm208, %v229, 0
  %v241 = vsel %vm208, %v230, 0
  %243 = vmatpush.msra.mxu0 0.0
  %244 = vmatpush.msra.mxu0 0.0
  %245 = vmatpush.msra.mxu0 0.0
  %246 = vmatpush.msra.mxu0 0.0
  %247 = vmatpush.msra.mxu0 0.0
  %248 = vmatpush.msra.mxu0 0.0
  %249 = vmatpush.msra.mxu0 0.0
  %250 = vmatpush.msra.mxu0 0.0
  %251 = vmatpush.msra.mxu0 0.0
  %252 = vmatpush.msra.mxu0 0.0
  %253 = vmatpush.msra.mxu0 0.0
  %254 = vmatpush.msra.mxu0 0.0
  %255 = vmatpush.msra.mxu0 0.0
  %256 = vmatpush.msra.mxu0 0.0
  %257 = vmatpush.msra.mxu0 %v234
  %258 = vmatpush.msra.mxu0 %v232
  %259 = vmatmul.f32.gmra.mxu0 %v238
  %v260 = vpop.f32.mrf.mxu0
  %v261 = vadd.f32 0.0, %v260
  %262 = vmatmul.f32.gmra.mxu0 %v241
  %v263 = vpop.f32.mrf.mxu0
  %v264 = vadd.f32 0.0, %v263
  %265 = vdwg.mxu0
  %266 = vrot.lane.b32.xlu0 %v162, 120
  %v267 = vpop.permute.xlu0 %266
  %268 = vrot.lane.b32.xlu0 %v164, 120
  %v269 = vpop.permute.xlu0 %268
  %270 = vrot.lane.b32.xlu0 %v162, 88
  %v271 = vpop.permute.xlu0 %270
  %272 = vrot.lane.b32.xlu0 %v164, 88
  %v273 = vpop.permute.xlu0 %272
  %v274 = vsel %vm172, %v267, 0
  %v276 = vsel %vm172, %v269, 0
  %v278 = vsel %vm172, %v271, 0
  %v280 = vsel %vm172, %v273, 0
  %282 = vmatpush.xpose.msra.mxu0 0.0
  %283 = vmatpush.xpose.msra.mxu0 0.0
  %284 = vmatpush.xpose.msra.mxu0 0.0
  %285 = vmatpush.xpose.msra.mxu0 0.0
  %286 = vmatpush.xpose.msra.mxu0 0.0
  %287 = vmatpush.xpose.msra.mxu0 0.0
  %288 = vmatpush.xpose.msra.mxu0 0.0
  %289 = vmatpush.xpose.msra.mxu0 0.0
  %290 = vmatpush.xpose.msra.mxu0 0.0
  %291 = vmatpush.xpose.msra.mxu0 0.0
  %292 = vmatpush.xpose.msra.mxu0 0.0
  %293 = vmatpush.xpose.msra.mxu0 0.0
  %294 = vmatpush.xpose.msra.mxu0 0.0
  %295 = vmatpush.xpose.msra.mxu0 0.0
  %296 = vmatpush.xpose.msra.mxu0 %v280
  %297 = vmatpush.xpose.msra.mxu0 %v278
  %298 = vmatmul.f32.gmra.mxu0 %v274
  %v299 = vpop.f32.mrf.mxu0
  %v300 = vadd.f32 0.0, %v299
  %301 = vmatmul.f32.gmra.mxu0 %v276
  %v302 = vpop.f32.mrf.mxu0
  %v303 = vadd.f32 0.0, %v302
  %304 = vdwg.mxu0
  %v305 = vmul.f32 %v300, 0.35355338
  %v306 = vmul.f32 %v303, 0.35355338
  %v307 = vadd.f32 %v305, %v60
  %v308 = vadd.f32 %v306, %v61
  %v309 = vsel %vm208, %v307, -inf
  %310 = vmax.xlane.f32.xlu0 %v309
  %v311 = vpop.xlane.xlu0 %310
  %v312 = vsel %vm208, %v308, -inf
  %313 = vmax.xlane.f32.xlu0 %v312
  %v314 = vpop.xlane.xlu0 %313
  %v315 = vsub.f32 %v307, %v311
  %v316 = vsub.f32 %v308, %v314
  %v317 = vmul.f32 %v315, 1.442695
  %v318 = vpow.pop %v317
  %v319 = vmul.f32 %v316, 1.442695
  %v320 = vpow.pop %v319
  %v321 = vsel %vm208, %v318, 0.0
  %322 = vadd.xlane.f32.xlu0 %v321
  %v323 = vpop.xlane.xlu0 %322
  %v324 = vsel %vm208, %v320, 0.0
  %325 = vadd.xlane.f32.xlu0 %v324
  %v326 = vpop.xlane.xlu0 %325
  %v327 = vrcp.pop %v323
  %v328 = vrcp.pop %v326
  %v329 = vmul.f32 %v318, %v327
  %v330 = vmul.f32 %v320, %v328
  %331 = vrot.lane.b32.xlu0 %v162, 56
  %v332 = vpop.permute.xlu0 %331
  %333 = vrot.lane.b32.xlu0 %v164, 56
  %v334 = vpop.permute.xlu0 %333
  %v338 = vsel %vm208, %v329, 0
  %v341 = vsel %vm208, %v330, 0
  %343 = vmatpush.msra.mxu0 0.0
  %344 = vmatpush.msra.mxu0 0.0
  %345 = vmatpush.msra.mxu0 0.0
  %346 = vmatpush.msra.mxu0 0.0
  %347 = vmatpush.msra.mxu0 0.0
  %348 = vmatpush.msra.mxu0 0.0
  %349 = vmatpush.msra.mxu0 0.0
  %350 = vmatpush.msra.mxu0 0.0
  %351 = vmatpush.msra.mxu0 0.0
  %352 = vmatpush.msra.mxu0 0.0
  %353 = vmatpush.msra.mxu0 0.0
  %354 = vmatpush.msra.mxu0 0.0
  %355 = vmatpush.msra.mxu0 0.0
  %356 = vmatpush.msra.mxu0 0.0
  %357 = vmatpush.msra.mxu0 %v334
  %358 = vmatpush.msra.mxu0 %v332
  %359 = vmatmul.f32.gmra.mxu0 %v338
  %v360 = vpop.f32.mrf.mxu0
  %v361 = vadd.f32 0.0, %v360
  %362 = vmatmul.f32.gmra.mxu0 %v341
  %v363 = vpop.f32.mrf.mxu0
  %v364 = vadd.f32 0.0, %v363
  %365 = vdwg.mxu0
  %366 = vrot.lane.b32.xlu0 %v162, 112
  %v367 = vpop.permute.xlu0 %366
  %368 = vrot.lane.b32.xlu0 %v164, 112
  %v369 = vpop.permute.xlu0 %368
  %370 = vrot.lane.b32.xlu0 %v162, 80
  %v371 = vpop.permute.xlu0 %370
  %372 = vrot.lane.b32.xlu0 %v164, 80
  %v373 = vpop.permute.xlu0 %372
  %v374 = vsel %vm172, %v367, 0
  %v376 = vsel %vm172, %v369, 0
  %v378 = vsel %vm172, %v371, 0
  %v380 = vsel %vm172, %v373, 0
  %382 = vmatpush.xpose.msra.mxu0 0.0
  %383 = vmatpush.xpose.msra.mxu0 0.0
  %384 = vmatpush.xpose.msra.mxu0 0.0
  %385 = vmatpush.xpose.msra.mxu0 0.0
  %386 = vmatpush.xpose.msra.mxu0 0.0
  %387 = vmatpush.xpose.msra.mxu0 0.0
  %388 = vmatpush.xpose.msra.mxu0 0.0
  %389 = vmatpush.xpose.msra.mxu0 0.0
  %390 = vmatpush.xpose.msra.mxu0 0.0
  %391 = vmatpush.xpose.msra.mxu0 0.0
  %392 = vmatpush.xpose.msra.mxu0 0.0
  %393 = vmatpush.xpose.msra.mxu0 0.0
  %394 = vmatpush.xpose.msra.mxu0 0.0
  %395 = vmatpush.xpose.msra.mxu0 0.0
  %396 = vmatpush.xpose.msra.mxu0 %v380
  %397 = vmatpush.xpose.msra.mxu0 %v378
  %398 = vmatmul.f32.gmra.mxu0 %v374
  %v399 = vpop.f32.mrf.mxu0
  %v400 = vadd.f32 0.0, %v399
  %401 = vmatmul.f32.gmra.mxu0 %v376
  %v402 = vpop.f32.mrf.mxu0
  %v403 = vadd.f32 0.0, %v402
  %404 = vdwg.mxu0
  %v405 = vmul.f32 %v400, 0.35355338
  %v406 = vmul.f32 %v403, 0.35355338
  %v407 = vadd.f32 %v405, %v60
  %v408 = vadd.f32 %v406, %v61
  %v409 = vsel %vm208, %v407, -inf
  %410 = vmax.xlane.f32.xlu0 %v409
  %v411 = vpop.xlane.xlu0 %410
  %v412 = vsel %vm208, %v408, -inf
  %413 = vmax.xlane.f32.xlu0 %v412
  %v414 = vpop.xlane.xlu0 %413
  %v415 = vsub.f32 %v407, %v411
  %v416 = vsub.f32 %v408, %v414
  %v417 = vmul.f32 %v415, 1.442695
  %v418 = vpow.pop %v417
  %v419 = vmul.f32 %v416, 1.442695
  %v420 = vpow.pop %v419
  %v421 = vsel %vm208, %v418, 0.0
  %422 = vadd.xlane.f32.xlu0 %v421
  %v423 = vpop.xlane.xlu0 %422
  %v424 = vsel %vm208, %v420, 0.0
  %425 = vadd.xlane.f32.xlu0 %v424
  %v426 = vpop.xlane.xlu0 %425
  %v427 = vrcp.pop %v423
  %v428 = vrcp.pop %v426
  %v429 = vmul.f32 %v418, %v427
  %v430 = vmul.f32 %v420, %v428
  %431 = vrot.lane.b32.xlu0 %v162, 48
  %v432 = vpop.permute.xlu0 %431
  %433 = vrot.lane.b32.xlu0 %v164, 48
  %v434 = vpop.permute.xlu0 %433
  %v438 = vsel %vm208, %v429, 0
  %v441 = vsel %vm208, %v430, 0
  %443 = vmatpush.msra.mxu0 0.0
  %444 = vmatpush.msra.mxu0 0.0
  %445 = vmatpush.msra.mxu0 0.0
  %446 = vmatpush.msra.mxu0 0.0
  %447 = vmatpush.msra.mxu0 0.0
  %448 = vmatpush.msra.mxu0 0.0
  %449 = vmatpush.msra.mxu0 0.0
  %450 = vmatpush.msra.mxu0 0.0
  %451 = vmatpush.msra.mxu0 0.0
  %452 = vmatpush.msra.mxu0 0.0
  %453 = vmatpush.msra.mxu0 0.0
  %454 = vmatpush.msra.mxu0 0.0
  %455 = vmatpush.msra.mxu0 0.0
  %456 = vmatpush.msra.mxu0 0.0
  %457 = vmatpush.msra.mxu0 %v434
  %458 = vmatpush.msra.mxu0 %v432
  %459 = vmatmul.f32.gmra.mxu0 %v438
  %v460 = vpop.f32.mrf.mxu0
  %v461 = vadd.f32 0.0, %v460
  %462 = vmatmul.f32.gmra.mxu0 %v441
  %v463 = vpop.f32.mrf.mxu0
  %v464 = vadd.f32 0.0, %v463
  %465 = vdwg.mxu0
  %466 = vrot.lane.b32.xlu0 %v162, 104
  %v467 = vpop.permute.xlu0 %466
  %468 = vrot.lane.b32.xlu0 %v164, 104
  %v469 = vpop.permute.xlu0 %468
  %470 = vrot.lane.b32.xlu0 %v162, 72
  %v471 = vpop.permute.xlu0 %470
  %472 = vrot.lane.b32.xlu0 %v164, 72
  %v473 = vpop.permute.xlu0 %472
  %v474 = vsel %vm172, %v467, 0
  %v476 = vsel %vm172, %v469, 0
  %v478 = vsel %vm172, %v471, 0
  %v480 = vsel %vm172, %v473, 0
  %482 = vmatpush.xpose.msra.mxu0 0.0
  %483 = vmatpush.xpose.msra.mxu0 0.0
  %484 = vmatpush.xpose.msra.mxu0 0.0
  %485 = vmatpush.xpose.msra.mxu0 0.0
  %486 = vmatpush.xpose.msra.mxu0 0.0
  %487 = vmatpush.xpose.msra.mxu0 0.0
  %488 = vmatpush.xpose.msra.mxu0 0.0
  %489 = vmatpush.xpose.msra.mxu0 0.0
  %490 = vmatpush.xpose.msra.mxu0 0.0
  %491 = vmatpush.xpose.msra.mxu0 0.0
  %492 = vmatpush.xpose.msra.mxu0 0.0
  %493 = vmatpush.xpose.msra.mxu0 0.0
  %494 = vmatpush.xpose.msra.mxu0 0.0
  %495 = vmatpush.xpose.msra.mxu0 0.0
  %496 = vmatpush.xpose.msra.mxu0 %v480
  %497 = vmatpush.xpose.msra.mxu0 %v478
  %498 = vmatmul.f32.gmra.mxu0 %v474
  %v499 = vpop.f32.mrf.mxu0
  %v500 = vadd.f32 0.0, %v499
  %501 = vmatmul.f32.gmra.mxu0 %v476
  %v502 = vpop.f32.mrf.mxu0
  %v503 = vadd.f32 0.0, %v502
  %504 = vdwg.mxu0
  %v505 = vmul.f32 %v500, 0.35355338
  %v506 = vmul.f32 %v503, 0.35355338
  %v507 = vadd.f32 %v505, %v60
  %v508 = vadd.f32 %v506, %v61
  %v509 = vsel %vm208, %v507, -inf
  %510 = vmax.xlane.f32.xlu0 %v509
  %v511 = vpop.xlane.xlu0 %510
  %v512 = vsel %vm208, %v508, -inf
  %513 = vmax.xlane.f32.xlu0 %v512
  %v514 = vpop.xlane.xlu0 %513
  %v515 = vsub.f32 %v507, %v511
  %v516 = vsub.f32 %v508, %v514
  %v517 = vmul.f32 %v515, 1.442695
  %v518 = vpow.pop %v517
  %v519 = vmul.f32 %v516, 1.442695
  %v520 = vpow.pop %v519
  %v521 = vsel %vm208, %v518, 0.0
  %522 = vadd.xlane.f32.xlu0 %v521
  %v523 = vpop.xlane.xlu0 %522
  %v524 = vsel %vm208, %v520, 0.0
  %525 = vadd.xlane.f32.xlu0 %v524
  %v526 = vpop.xlane.xlu0 %525
  %v527 = vrcp.pop %v523
  %v528 = vrcp.pop %v526
  %v529 = vmul.f32 %v518, %v527
  %v530 = vmul.f32 %v520, %v528
  %531 = vrot.lane.b32.xlu0 %v162, 40
  %v532 = vpop.permute.xlu0 %531
  %533 = vrot.lane.b32.xlu0 %v164, 40
  %v534 = vpop.permute.xlu0 %533
  %v538 = vsel %vm208, %v529, 0
  %v541 = vsel %vm208, %v530, 0
  %543 = vmatpush.msra.mxu0 0.0
  %544 = vmatpush.msra.mxu0 0.0
  %545 = vmatpush.msra.mxu0 0.0
  %546 = vmatpush.msra.mxu0 0.0
  %547 = vmatpush.msra.mxu0 0.0
  %548 = vmatpush.msra.mxu0 0.0
  %549 = vmatpush.msra.mxu0 0.0
  %550 = vmatpush.msra.mxu0 0.0
  %551 = vmatpush.msra.mxu0 0.0
  %552 = vmatpush.msra.mxu0 0.0
  %553 = vmatpush.msra.mxu0 0.0
  %554 = vmatpush.msra.mxu0 0.0
  %555 = vmatpush.msra.mxu0 0.0
  %556 = vmatpush.msra.mxu0 0.0
  %557 = vmatpush.msra.mxu0 %v534
  %558 = vmatpush.msra.mxu0 %v532
  %559 = vmatmul.f32.gmra.mxu0 %v538
  %v560 = vpop.f32.mrf.mxu0
  %v561 = vadd.f32 0.0, %v560
  %562 = vmatmul.f32.gmra.mxu0 %v541
  %v563 = vpop.f32.mrf.mxu0
  %v564 = vadd.f32 0.0, %v563
  %565 = vdwg.mxu0
  %568 = vrot.lane.b32.xlu0 %v361, 8
  %v569 = vpop.permute.xlu0 %568
  %570 = vrot.lane.b32.xlu0 %v364, 8
  %v571 = vpop.permute.xlu0 %570
  %576 = vrot.lane.b32.xlu0 %v461, 16
  %v577 = vpop.permute.xlu0 %576
  %578 = vrot.lane.b32.xlu0 %v464, 16
  %v579 = vpop.permute.xlu0 %578
  %584 = vrot.lane.b32.xlu0 %v561, 24
  %v585 = vpop.permute.xlu0 %584
  %586 = vrot.lane.b32.xlu0 %v564, 24
  %v587 = vpop.permute.xlu0 %586
  %v590 = vsel %vm172, %v261, %v569
  %v591 = vsel %vm172, %v264, %v571
  %v592 = vsel %vm208, %v590, %v577
  %v593 = vsel %vm208, %v591, %v579
  %vm594 = vcmask 195584
  %v595 = vsel %vm594, %v592, %v585
  %v596 = vsel %vm594, %v593, %v587
  %v597 = vld [vmem:[%s6] sm:$0xf]
  %v598 = vld [vmem:[%s6 + $0x4] sm:$0xf]
  %v599 = vld [vmem:[%s6 + $0x8] sm:$0xf]
  %v600 = vld [vmem:[%s6 + $0xc] sm:$0xf]
  %v601 = vpack.c.bf16 %v596, %v595
  %v602 = vld [vmem:[%s7] sm:$0x1]
  %v604 = vperm.slane %v602, 0
  %v610 = vunpack.c.l.b16 %v597
  %v611 = vunpack.c.l.b16 %v598
  %v612 = vunpack.c.l.b16 %v599
  %v613 = vunpack.c.l.b16 %v600
  %v614 = vpack.c.b16 %v611, %v610
  %v615 = vpack.c.b16 %v613, %v612
  %v619 = vsel %vm66, %v601, 0
  %621 = vmatpush.bf16.msra.mxu0 0
  %622 = vmatpush.bf16.msra.mxu0 0
  %623 = vmatpush.bf16.msra.mxu0 0
  %624 = vmatpush.bf16.msra.mxu0 0
  %625 = vmatpush.bf16.msra.mxu0 0
  %626 = vmatpush.bf16.msra.mxu0 0
  %627 = vmatpush.bf16.msra.mxu0 %v615
  %628 = vmatpush.bf16.msra.mxu0 %v614
  %629 = vmatmul.bf16.gmra.mxu0 %v619
  %v630 = vpop.f32.mrf.mxu0
  %v631 = vadd.f32 %v604, %v630
  %v632 = vpop.f32.mrf.mxu0
  %v633 = vadd.f32 %v604, %v632
  %634 = vdwg.mxu0
  %v635 = vadd.f32 %v631, %v126
  %v636 = vadd.f32 %v633, %v127
  %v637 = vld [vmem:[%s8] sm:$0x1]
  %v638 = vld [vmem:[%s9] sm:$0x1]
  %v639 = vsel %vm66, %v635, 0.0
  %640 = vadd.xlane.f32.xlu0 %v639
  %v641 = vpop.xlane.xlu0 %640
  %v642 = vsel %vm66, %v636, 0.0
  %643 = vadd.xlane.f32.xlu0 %v642
  %v644 = vpop.xlane.xlu0 %643
  %v645 = vmul.f32 %v641, %v79
  %v646 = vmul.f32 %v644, %v79
  %v647 = vsub.f32 %v635, %v645
  %v648 = vsub.f32 %v636, %v646
  %v649 = vmul.f32 %v647, %v647
  %v650 = vmul.f32 %v648, %v648
  %v651 = vsel %vm66, %v649, 0.0
  %652 = vadd.xlane.f32.xlu0 %v651
  %v653 = vpop.xlane.xlu0 %652
  %v654 = vsel %vm66, %v650, 0.0
  %655 = vadd.xlane.f32.xlu0 %v654
  %v656 = vpop.xlane.xlu0 %655
  %v657 = vmul.f32 %v653, %v79
  %v658 = vmul.f32 %v656, %v79
  %v659 = vadd.f32 %v657, 1e-12
  %v660 = vadd.f32 %v658, 1e-12
  %v661 = vrsqrt.pop %v659
  %v662 = vmul.f32 %v661, %v659
  %v663 = vmul.f32 %v662, %v661
  %v664 = vmul.f32 0.5, %v663
  %v665 = vsub.f32 1.5, %v664
  %v666 = vmul.f32 %v661, %v665
  %vm667 = vweird.f32 %v659
  %vm668 = vweird.f32 %v661
  %vm669 = vmor %vm667, %vm668
  %v670 = vsel %vm669, %v661, %v666
  %v671 = vrsqrt.pop %v660
  %v672 = vmul.f32 %v671, %v660
  %v673 = vmul.f32 %v672, %v671
  %v674 = vmul.f32 0.5, %v673
  %v675 = vsub.f32 1.5, %v674
  %v676 = vmul.f32 %v671, %v675
  %vm677 = vweird.f32 %v660
  %vm678 = vweird.f32 %v671
  %vm679 = vmor %vm677, %vm678
  %v680 = vsel %vm679, %v671, %v676
  %v681 = vmul.f32 %v647, %v670
  %v682 = vmul.f32 %v648, %v680
  %v684 = vperm.slane %v637, 0
  %v686 = vmul.f32 %v681, %v684
  %v687 = vmul.f32 %v682, %v684
  %v689 = vperm.slane %v638, 0
  %v691 = vadd.f32 %v686, %v689
  %v692 = vadd.f32 %v687, %v689
  %v693 = vld [vmem:[%s10] sm:$0xf]
  %v694 = vld [vmem:[%s10 + $0x4] sm:$0xf]
  %v695 = vld [vmem:[%s10 + $0x8] sm:$0xf]
  %v696 = vld [vmem:[%s10 + $0xc] sm:$0xf]
  %v697 = vpack.c.bf16 %v692, %v691
  %v698 = vld [vmem:[%s11] sm:$0x1]
  %v700 = vperm.slane %v698, 0
  %v706 = vunpack.c.l.b16 %v693
  %v707 = vunpack.c.l.b16 %v694
  %v708 = vunpack.c.l.b16 %v695
  %v709 = vunpack.c.l.b16 %v696
  %v710 = vpack.c.b16 %v707, %v706
  %v711 = vpack.c.b16 %v709, %v708
  %v715 = vsel %vm66, %v697, 0
  %717 = vmatpush.bf16.msra.mxu0 0
  %718 = vmatpush.bf16.msra.mxu0 0
  %719 = vmatpush.bf16.msra.mxu0 0
  %720 = vmatpush.bf16.msra.mxu0 0
  %721 = vmatpush.bf16.msra.mxu0 0
  %722 = vmatpush.bf16.msra.mxu0 0
  %723 = vmatpush.bf16.msra.mxu0 %v711
  %724 = vmatpush.bf16.msra.mxu0 %v710
  %725 = vmatmul.bf16.gmra.mxu0 %v715
  %v726 = vpop.f32.mrf.mxu0
  %v727 = vadd.f32 %v700, %v726
  %v728 = vpop.f32.mrf.mxu0
  %v729 = vadd.f32 %v700, %v728
  %730 = vdwg.mxu0
  %v731 = vmul.f32 %v727, 0.5
  %v732 = vmul.f32 %v729, 0.5
  %v733 = vmul.f32 %v727, 0.044715
  %v734 = vmul.f32 %v729, 0.044715
  %v735 = vmul.f32 %v733, %v727
  %v736 = vmul.f32 %v734, %v729
  %v737 = vmul.f32 %v735, %v727
  %v738 = vmul.f32 %v736, %v729
  %v739 = vadd.f32 %v727, %v737
  %v740 = vadd.f32 %v729, %v738
  %v741 = vmul.f32 %v739, 0.7978846
  %v742 = vmul.f32 %v740, 0.7978846
  %v743 = vtanh.pop %v741
  %v744 = vtanh.pop %v742
  %v745 = vadd.f32 %v743, 1.0
  %v746 = vadd.f32 %v744, 1.0
  %v747 = vmul.f32 %v731, %v745
  %v748 = vmul.f32 %v732, %v746
  %v749 = vld [vmem:[%s12] sm:$0xf]
  %v750 = vld [vmem:[%s12 + $0x4] sm:$0xf]
  %v751 = vld [vmem:[%s12 + $0x8] sm:$0xf]
  %v752 = vld [vmem:[%s12 + $0xc] sm:$0xf]
  %v753 = vld [vmem:[%s12 + $0x10] sm:$0xf]
  %v754 = vld [vmem:[%s12 + $0x14] sm:$0xf]
  %v755 = vld [vmem:[%s12 + $0x18] sm:$0xf]
  %v756 = vld [vmem:[%s12 + $0x1c] sm:$0xf]
  %v757 = vld [vmem:[%s12 + $0x20] sm:$0xf]
  %v758 = vld [vmem:[%s12 + $0x24] sm:$0xf]
  %v759 = vld [vmem:[%s12 + $0x28] sm:$0xf]
  %v760 = vld [vmem:[%s12 + $0x2c] sm:$0xf]
  %v761 = vld [vmem:[%s12 + $0x30] sm:$0xf]
  %v762 = vld [vmem:[%s12 + $0x34] sm:$0xf]
  %v763 = vld [vmem:[%s12 + $0x38] sm:$0xf]
  %v764 = vld [vmem:[%s12 + $0x3c] sm:$0xf]
  %v765 = vpack.c.bf16 %v748, %v747
  %v766 = vld [vmem:[%s13] sm:$0x1]
  %v768 = vperm.slane %v766, 0
  %v786 = vunpack.c.l.b16 %v749
  %v787 = vunpack.c.l.b16 %v750
  %v788 = vunpack.c.l.b16 %v751
  %v789 = vunpack.c.l.b16 %v752
  %v790 = vunpack.c.l.b16 %v753
  %v791 = vunpack.c.l.b16 %v754
  %v792 = vunpack.c.l.b16 %v755
  %v793 = vunpack.c.l.b16 %v756
  %v794 = vunpack.c.l.b16 %v757
  %v795 = vunpack.c.l.b16 %v758
  %v796 = vunpack.c.l.b16 %v759
  %v797 = vunpack.c.l.b16 %v760
  %v798 = vunpack.c.l.b16 %v761
  %v799 = vunpack.c.l.b16 %v762
  %v800 = vunpack.c.l.b16 %v763
  %v801 = vunpack.c.l.b16 %v764
  %v802 = vpack.c.b16 %v787, %v786
  %v803 = vpack.c.b16 %v789, %v788
  %v804 = vpack.c.b16 %v791, %v790
  %v805 = vpack.c.b16 %v793, %v792
  %v806 = vpack.c.b16 %v795, %v794
  %v807 = vpack.c.b16 %v797, %v796
  %v808 = vpack.c.b16 %v799, %v798
  %v809 = vpack.c.b16 %v801, %v800
  %818 = vmatpush.bf16.msra.mxu0 %v809
  %819 = vmatpush.bf16.msra.mxu0 %v808
  %820 = vmatpush.bf16.msra.mxu0 %v807
  %821 = vmatpush.bf16.msra.mxu0 %v806
  %822 = vmatpush.bf16.msra.mxu0 %v805
  %823 = vmatpush.bf16.msra.mxu0 %v804
  %824 = vmatpush.bf16.msra.mxu0 %v803
  %825 = vmatpush.bf16.msra.mxu0 %v802
  %826 = vmatmul.bf16.gmra.mxu0 %v765
  %v827 = vpop.f32.mrf.mxu0
  %v828 = vadd.f32 %v768, %v827
  %v829 = vpop.f32.mrf.mxu0
  %v830 = vadd.f32 %v768, %v829
  %831 = vdwg.mxu0
  %v832 = vadd.f32 %v828, %v691
  %v833 = vadd.f32 %v830, %v692
  %v834 = vld [vmem:[%s14] sm:$0x1]
  %v835 = vld [vmem:[%s15] sm:$0x1]
  %v836 = vsel %vm66, %v832, 0.0
  %837 = vadd.xlane.f32.xlu0 %v836
  %v838 = vpop.xlane.xlu0 %837
  %v839 = vsel %vm66, %v833, 0.0
  %840 = vadd.xlane.f32.xlu0 %v839
  %v841 = vpop.xlane.xlu0 %840
  %v842 = vmul.f32 %v838, %v79
  %v843 = vmul.f32 %v841, %v79
  %v844 = vsub.f32 %v832, %v842
  %v845 = vsub.f32 %v833, %v843
  %v846 = vmul.f32 %v844, %v844
  %v847 = vmul.f32 %v845, %v845
  %v848 = vsel %vm66, %v846, 0.0
  %849 = vadd.xlane.f32.xlu0 %v848
  %v850 = vpop.xlane.xlu0 %849
  %v851 = vsel %vm66, %v847, 0.0
  %852 = vadd.xlane.f32.xlu0 %v851
  %v853 = vpop.xlane.xlu0 %852
  %v854 = vmul.f32 %v850, %v79
  %v855 = vmul.f32 %v853, %v79
  %v856 = vadd.f32 %v854, 1e-12
  %v857 = vadd.f32 %v855, 1e-12
  %v858 = vrsqrt.pop %v856
  %v859 = vmul.f32 %v858, %v856
  %v860 = vmul.f32 %v859, %v858
  %v861 = vmul.f32 0.5, %v860
  %v862 = vsub.f32 1.5, %v861
  %v863 = vmul.f32 %v858, %v862
  %vm864 = vweird.f32 %v856
  %vm865 = vweird.f32 %v858
  %vm866 = vmor %vm864, %vm865
  %v867 = vsel %vm866, %v858, %v863
  %v868 = vrsqrt.pop %v857
  %v869 = vmul.f32 %v868, %v857
  %v870 = vmul.f32 %v869, %v868
  %v871 = vmul.f32 0.5, %v870
  %v872 = vsub.f32 1.5, %v871
  %v873 = vmul.f32 %v868, %v872
  %vm874 = vweird.f32 %v857
  %vm875 = vweird.f32 %v868
  %vm876 = vmor %vm874, %vm875
  %v877 = vsel %vm876, %v868, %v873
  %v878 = vmul.f32 %v844, %v867
  %v879 = vmul.f32 %v845, %v877
  %v881 = vperm.slane %v834, 0
  %v883 = vmul.f32 %v878, %v881
  %v884 = vmul.f32 %v879, %v881
  %v886 = vperm.slane %v835, 0
  %v888 = vadd.f32 %v883, %v886
  %v889 = vadd.f32 %v884, %v886
  %s890 = scalar_lea.vmem %s4, 16
  %v891 = vld [vmem:[%s890] sm:$0xf]
  %v892 = vld [vmem:[%s890 + $0x4] sm:$0xf]
  %v893 = vld [vmem:[%s890 + $0x8] sm:$0xf]
  %v894 = vld [vmem:[%s890 + $0xc] sm:$0xf]
  %v895 = vpack.c.bf16 %v889, %v888
  %s896 = scalar_lea.vmem %s5, 1
  %v897 = vld [vmem:[%s896] sm:$0x1]
  %v899 = vperm.slane %v897, 0
  %v905 = vunpack.c.l.b16 %v891
  %v906 = vunpack.c.l.b16 %v892
  %v907 = vunpack.c.l.b16 %v893
  %v908 = vunpack.c.l.b16 %v894
  %v909 = vpack.c.b16 %v906, %v905
  %v910 = vpack.c.b16 %v908, %v907
  %v914 = vsel %vm66, %v895, 0
  %916 = vmatpush.bf16.msra.mxu0 0
  %917 = vmatpush.bf16.msra.mxu0 0
  %918 = vmatpush.bf16.msra.mxu0 0
  %919 = vmatpush.bf16.msra.mxu0 0
  %920 = vmatpush.bf16.msra.mxu0 0
  %921 = vmatpush.bf16.msra.mxu0 0
  %922 = vmatpush.bf16.msra.mxu0 %v910
  %923 = vmatpush.bf16.msra.mxu0 %v909
  %924 = vmatmul.bf16.gmra.mxu0 %v914
  %v925 = vpop.f32.mrf.mxu0
  %v926 = vadd.f32 %v899, %v925
  %v927 = vpop.f32.mrf.mxu0
  %v928 = vadd.f32 %v899, %v927
  %929 = vdwg.mxu0
  %932 = vrot.lane.b32.xlu0 %v926, 96
  %v933 = vpop.permute.xlu0 %932
  %934 = vrot.lane.b32.xlu0 %v928, 96
  %v935 = vpop.permute.xlu0 %934
  %v936 = vsel %vm172, %v926, 0
  %v938 = vsel %vm172, %v928, 0
  %v940 = vsel %vm172, %v933, 0
  %v942 = vsel %vm172, %v935, 0
  %944 = vmatpush.xpose.msra.mxu0 0.0
  %945 = vmatpush.xpose.msra.mxu0 0.0
  %946 = vmatpush.xpose.msra.mxu0 0.0
  %947 = vmatpush.xpose.msra.mxu0 0.0
  %948 = vmatpush.xpose.msra.mxu0 0.0
  %949 = vmatpush.xpose.msra.mxu0 0.0
  %950 = vmatpush.xpose.msra.mxu0 0.0
  %951 = vmatpush.xpose.msra.mxu0 0.0
  %952 = vmatpush.xpose.msra.mxu0 0.0
  %953 = vmatpush.xpose.msra.mxu0 0.0
  %954 = vmatpush.xpose.msra.mxu0 0.0
  %955 = vmatpush.xpose.msra.mxu0 0.0
  %956 = vmatpush.xpose.msra.mxu0 0.0
  %957 = vmatpush.xpose.msra.mxu0 0.0
  %958 = vmatpush.xpose.msra.mxu0 %v942
  %959 = vmatpush.xpose.msra.mxu0 %v940
  %960 = vmatmul.f32.gmra.mxu0 %v936
  %v961 = vpop.f32.mrf.mxu0
  %v962 = vadd.f32 0.0, %v961
  %963 = vmatmul.f32.gmra.mxu0 %v938
  %v964 = vpop.f32.mrf.mxu0
  %v965 = vadd.f32 0.0, %v964
  %966 = vdwg.mxu0
  %v967 = vmul.f32 %v962, 0.35355338
  %v968 = vmul.f32 %v965, 0.35355338
  %v969 = vadd.f32 %v967, %v60
  %v970 = vadd.f32 %v968, %v61
  %v971 = vsel %vm208, %v969, -inf
  %972 = vmax.xlane.f32.xlu0 %v971
  %v973 = vpop.xlane.xlu0 %972
  %v974 = vsel %vm208, %v970, -inf
  %975 = vmax.xlane.f32.xlu0 %v974
  %v976 = vpop.xlane.xlu0 %975
  %v977 = vsub.f32 %v969, %v973
  %v978 = vsub.f32 %v970, %v976
  %v979 = vmul.f32 %v977, 1.442695
  %v980 = vpow.pop %v979
  %v981 = vmul.f32 %v978, 1.442695
  %v982 = vpow.pop %v981
  %v983 = vsel %vm208, %v980, 0.0
  %984 = vadd.xlane.f32.xlu0 %v983
  %v985 = vpop.xlane.xlu0 %984
  %v986 = vsel %vm208, %v982, 0.0
  %987 = vadd.xlane.f32.xlu0 %v986
  %v988 = vpop.xlane.xlu0 %987
  %v989 = vrcp.pop %v985
  %v990 = vrcp.pop %v988
  %v991 = vmul.f32 %v980, %v989
  %v992 = vmul.f32 %v982, %v990
  %993 = vrot.lane.b32.xlu0 %v926, 64
  %v994 = vpop.permute.xlu0 %993
  %995 = vrot.lane.b32.xlu0 %v928, 64
  %v996 = vpop.permute.xlu0 %995
  %v1000 = vsel %vm208, %v991, 0
  %v1003 = vsel %vm208, %v992, 0
  %1005 = vmatpush.msra.mxu0 0.0
  %1006 = vmatpush.msra.mxu0 0.0
  %1007 = vmatpush.msra.mxu0 0.0
  %1008 = vmatpush.msra.mxu0 0.0
  %1009 = vmatpush.msra.mxu0 0.0
  %1010 = vmatpush.msra.mxu0 0.0
  %1011 = vmatpush.msra.mxu0 0.0
  %1012 = vmatpush.msra.mxu0 0.0
  %1013 = vmatpush.msra.mxu0 0.0
  %1014 = vmatpush.msra.mxu0 0.0
  %1015 = vmatpush.msra.mxu0 0.0
  %1016 = vmatpush.msra.mxu0 0.0
  %1017 = vmatpush.msra.mxu0 0.0
  %1018 = vmatpush.msra.mxu0 0.0
  %1019 = vmatpush.msra.mxu0 %v996
  %1020 = vmatpush.msra.mxu0 %v994
  %1021 = vmatmul.f32.gmra.mxu0 %v1000
  %v1022 = vpop.f32.mrf.mxu0
  %v1023 = vadd.f32 0.0, %v1022
  %1024 = vmatmul.f32.gmra.mxu0 %v1003
  %v1025 = vpop.f32.mrf.mxu0
  %v1026 = vadd.f32 0.0, %v1025
  %1027 = vdwg.mxu0
  %1028 = vrot.lane.b32.xlu0 %v926, 120
  %v1029 = vpop.permute.xlu0 %1028
  %1030 = vrot.lane.b32.xlu0 %v928, 120
  %v1031 = vpop.permute.xlu0 %1030
  %1032 = vrot.lane.b32.xlu0 %v926, 88
  %v1033 = vpop.permute.xlu0 %1032
  %1034 = vrot.lane.b32.xlu0 %v928, 88
  %v1035 = vpop.permute.xlu0 %1034
  %v1036 = vsel %vm172, %v1029, 0
  %v1038 = vsel %vm172, %v1031, 0
  %v1040 = vsel %vm172, %v1033, 0
  %v1042 = vsel %vm172, %v1035, 0
  %1044 = vmatpush.xpose.msra.mxu0 0.0
  %1045 = vmatpush.xpose.msra.mxu0 0.0
  %1046 = vmatpush.xpose.msra.mxu0 0.0
  %1047 = vmatpush.xpose.msra.mxu0 0.0
  %1048 = vmatpush.xpose.msra.mxu0 0.0
  %1049 = vmatpush.xpose.msra.mxu0 0.0
  %1050 = vmatpush.xpose.msra.mxu0 0.0
  %1051 = vmatpush.xpose.msra.mxu0 0.0
  %1052 = vmatpush.xpose.msra.mxu0 0.0
  %1053 = vmatpush.xpose.msra.mxu0 0.0
  %1054 = vmatpush.xpose.msra.mxu0 0.0
  %1055 = vmatpush.xpose.msra.mxu0 0.0
  %1056 = vmatpush.xpose.msra.mxu0 0.0
  %1057 = vmatpush.xpose.msra.mxu0 0.0
  %1058 = vmatpush.xpose.msra.mxu0 %v1042
  %1059 = vmatpush.xpose.msra.mxu0 %v1040
  %1060 = vmatmul.f32.gmra.mxu0 %v1036
  %v1061 = vpop.f32.mrf.mxu0
  %v1062 = vadd.f32 0.0, %v1061
  %1063 = vmatmul.f32.gmra.mxu0 %v1038
  %v1064 = vpop.f32.mrf.mxu0
  %v1065 = vadd.f32 0.0, %v1064
  %1066 = vdwg.mxu0
  %v1067 = vmul.f32 %v1062, 0.35355338
  %v1068 = vmul.f32 %v1065, 0.35355338
  %v1069 = vadd.f32 %v1067, %v60
  %v1070 = vadd.f32 %v1068, %v61
  %v1071 = vsel %vm208, %v1069, -inf
  %1072 = vmax.xlane.f32.xlu0 %v1071
  %v1073 = vpop.xlane.xlu0 %1072
  %v1074 = vsel %vm208, %v1070, -inf
  %1075 = vmax.xlane.f32.xlu0 %v1074
  %v1076 = vpop.xlane.xlu0 %1075
  %v1077 = vsub.f32 %v1069, %v1073
  %v1078 = vsub.f32 %v1070, %v1076
  %v1079 = vmul.f32 %v1077, 1.442695
  %v1080 = vpow.pop %v1079
  %v1081 = vmul.f32 %v1078, 1.442695
  %v1082 = vpow.pop %v1081
  %v1083 = vsel %vm208, %v1080, 0.0
  %1084 = vadd.xlane.f32.xlu0 %v1083
  %v1085 = vpop.xlane.xlu0 %1084
  %v1086 = vsel %vm208, %v1082, 0.0
  %1087 = vadd.xlane.f32.xlu0 %v1086
  %v1088 = vpop.xlane.xlu0 %1087
  %v1089 = vrcp.pop %v1085
  %v1090 = vrcp.pop %v1088
  %v1091 = vmul.f32 %v1080, %v1089
  %v1092 = vmul.f32 %v1082, %v1090
  %1093 = vrot.lane.b32.xlu0 %v926, 56
  %v1094 = vpop.permute.xlu0 %1093
  %1095 = vrot.lane.b32.xlu0 %v928, 56
  %v1096 = vpop.permute.xlu0 %1095
  %v1100 = vsel %vm208, %v1091, 0
  %v1103 = vsel %vm208, %v1092, 0
  %1105 = vmatpush.msra.mxu0 0.0
  %1106 = vmatpush.msra.mxu0 0.0
  %1107 = vmatpush.msra.mxu0 0.0
  %1108 = vmatpush.msra.mxu0 0.0
  %1109 = vmatpush.msra.mxu0 0.0
  %1110 = vmatpush.msra.mxu0 0.0
  %1111 = vmatpush.msra.mxu0 0.0
  %1112 = vmatpush.msra.mxu0 0.0
  %1113 = vmatpush.msra.mxu0 0.0
  %1114 = vmatpush.msra.mxu0 0.0
  %1115 = vmatpush.msra.mxu0 0.0
  %1116 = vmatpush.msra.mxu0 0.0
  %1117 = vmatpush.msra.mxu0 0.0
  %1118 = vmatpush.msra.mxu0 0.0
  %1119 = vmatpush.msra.mxu0 %v1096
  %1120 = vmatpush.msra.mxu0 %v1094
  %1121 = vmatmul.f32.gmra.mxu0 %v1100
  %v1122 = vpop.f32.mrf.mxu0
  %v1123 = vadd.f32 0.0, %v1122
  %1124 = vmatmul.f32.gmra.mxu0 %v1103
  %v1125 = vpop.f32.mrf.mxu0
  %v1126 = vadd.f32 0.0, %v1125
  %1127 = vdwg.mxu0
  %1128 = vrot.lane.b32.xlu0 %v926, 112
  %v1129 = vpop.permute.xlu0 %1128
  %1130 = vrot.lane.b32.xlu0 %v928, 112
  %v1131 = vpop.permute.xlu0 %1130
  %1132 = vrot.lane.b32.xlu0 %v926, 80
  %v1133 = vpop.permute.xlu0 %1132
  %1134 = vrot.lane.b32.xlu0 %v928, 80
  %v1135 = vpop.permute.xlu0 %1134
  %v1136 = vsel %vm172, %v1129, 0
  %v1138 = vsel %vm172, %v1131, 0
  %v1140 = vsel %vm172, %v1133, 0
  %v1142 = vsel %vm172, %v1135, 0
  %1144 = vmatpush.xpose.msra.mxu0 0.0
  %1145 = vmatpush.xpose.msra.mxu0 0.0
  %1146 = vmatpush.xpose.msra.mxu0 0.0
  %1147 = vmatpush.xpose.msra.mxu0 0.0
  %1148 = vmatpush.xpose.msra.mxu0 0.0
  %1149 = vmatpush.xpose.msra.mxu0 0.0
  %1150 = vmatpush.xpose.msra.mxu0 0.0
  %1151 = vmatpush.xpose.msra.mxu0 0.0
  %1152 = vmatpush.xpose.msra.mxu0 0.0
  %1153 = vmatpush.xpose.msra.mxu0 0.0
  %1154 = vmatpush.xpose.msra.mxu0 0.0
  %1155 = vmatpush.xpose.msra.mxu0 0.0
  %1156 = vmatpush.xpose.msra.mxu0 0.0
  %1157 = vmatpush.xpose.msra.mxu0 0.0
  %1158 = vmatpush.xpose.msra.mxu0 %v1142
  %1159 = vmatpush.xpose.msra.mxu0 %v1140
  %1160 = vmatmul.f32.gmra.mxu0 %v1136
  %v1161 = vpop.f32.mrf.mxu0
  %v1162 = vadd.f32 0.0, %v1161
  %1163 = vmatmul.f32.gmra.mxu0 %v1138
  %v1164 = vpop.f32.mrf.mxu0
  %v1165 = vadd.f32 0.0, %v1164
  %1166 = vdwg.mxu0
  %v1167 = vmul.f32 %v1162, 0.35355338
  %v1168 = vmul.f32 %v1165, 0.35355338
  %v1169 = vadd.f32 %v1167, %v60
  %v1170 = vadd.f32 %v1168, %v61
  %v1171 = vsel %vm208, %v1169, -inf
  %1172 = vmax.xlane.f32.xlu0 %v1171
  %v1173 = vpop.xlane.xlu0 %1172
  %v1174 = vsel %vm208, %v1170, -inf
  %1175 = vmax.xlane.f32.xlu0 %v1174
  %v1176 = vpop.xlane.xlu0 %1175
  %v1177 = vsub.f32 %v1169, %v1173
  %v1178 = vsub.f32 %v1170, %v1176
  %v1179 = vmul.f32 %v1177, 1.442695
  %v1180 = vpow.pop %v1179
  %v1181 = vmul.f32 %v1178, 1.442695
  %v1182 = vpow.pop %v1181
  %v1183 = vsel %vm208, %v1180, 0.0
  %1184 = vadd.xlane.f32.xlu0 %v1183
  %v1185 = vpop.xlane.xlu0 %1184
  %v1186 = vsel %vm208, %v1182, 0.0
  %1187 = vadd.xlane.f32.xlu0 %v1186
  %v1188 = vpop.xlane.xlu0 %1187
  %v1189 = vrcp.pop %v1185
  %v1190 = vrcp.pop %v1188
  %v1191 = vmul.f32 %v1180, %v1189
  %v1192 = vmul.f32 %v1182, %v1190
  %1193 = vrot.lane.b32.xlu0 %v926, 48
  %v1194 = vpop.permute.xlu0 %1193
  %1195 = vrot.lane.b32.xlu0 %v928, 48
  %v1196 = vpop.permute.xlu0 %1195
  %v1200 = vsel %vm208, %v1191, 0
  %v1203 = vsel %vm208, %v1192, 0
  %1205 = vmatpush.msra.mxu0 0.0
  %1206 = vmatpush.msra.mxu0 0.0
  %1207 = vmatpush.msra.mxu0 0.0
  %1208 = vmatpush.msra.mxu0 0.0
  %1209 = vmatpush.msra.mxu0 0.0
  %1210 = vmatpush.msra.mxu0 0.0
  %1211 = vmatpush.msra.mxu0 0.0
  %1212 = vmatpush.msra.mxu0 0.0
  %1213 = vmatpush.msra.mxu0 0.0
  %1214 = vmatpush.msra.mxu0 0.0
  %1215 = vmatpush.msra.mxu0 0.0
  %1216 = vmatpush.msra.mxu0 0.0
  %1217 = vmatpush.msra.mxu0 0.0
  %1218 = vmatpush.msra.mxu0 0.0
  %1219 = vmatpush.msra.mxu0 %v1196
  %1220 = vmatpush.msra.mxu0 %v1194
  %1221 = vmatmul.f32.gmra.mxu0 %v1200
  %v1222 = vpop.f32.mrf.mxu0
  %v1223 = vadd.f32 0.0, %v1222
  %1224 = vmatmul.f32.gmra.mxu0 %v1203
  %v1225 = vpop.f32.mrf.mxu0
  %v1226 = vadd.f32 0.0, %v1225
  %1227 = vdwg.mxu0
  %1228 = vrot.lane.b32.xlu0 %v926, 104
  %v1229 = vpop.permute.xlu0 %1228
  %1230 = vrot.lane.b32.xlu0 %v928, 104
  %v1231 = vpop.permute.xlu0 %1230
  %1232 = vrot.lane.b32.xlu0 %v926, 72
  %v1233 = vpop.permute.xlu0 %1232
  %1234 = vrot.lane.b32.xlu0 %v928, 72
  %v1235 = vpop.permute.xlu0 %1234
  %v1236 = vsel %vm172, %v1229, 0
  %v1238 = vsel %vm172, %v1231, 0
  %v1240 = vsel %vm172, %v1233, 0
  %v1242 = vsel %vm172, %v1235, 0
  %1244 = vmatpush.xpose.msra.mxu0 0.0
  %1245 = vmatpush.xpose.msra.mxu0 0.0
  %1246 = vmatpush.xpose.msra.mxu0 0.0
  %1247 = vmatpush.xpose.msra.mxu0 0.0
  %1248 = vmatpush.xpose.msra.mxu0 0.0
  %1249 = vmatpush.xpose.msra.mxu0 0.0
  %1250 = vmatpush.xpose.msra.mxu0 0.0
  %1251 = vmatpush.xpose.msra.mxu0 0.0
  %1252 = vmatpush.xpose.msra.mxu0 0.0
  %1253 = vmatpush.xpose.msra.mxu0 0.0
  %1254 = vmatpush.xpose.msra.mxu0 0.0
  %1255 = vmatpush.xpose.msra.mxu0 0.0
  %1256 = vmatpush.xpose.msra.mxu0 0.0
  %1257 = vmatpush.xpose.msra.mxu0 0.0
  %1258 = vmatpush.xpose.msra.mxu0 %v1242
  %1259 = vmatpush.xpose.msra.mxu0 %v1240
  %1260 = vmatmul.f32.gmra.mxu0 %v1236
  %v1261 = vpop.f32.mrf.mxu0
  %v1262 = vadd.f32 0.0, %v1261
  %1263 = vmatmul.f32.gmra.mxu0 %v1238
  %v1264 = vpop.f32.mrf.mxu0
  %v1265 = vadd.f32 0.0, %v1264
  %1266 = vdwg.mxu0
  %v1267 = vmul.f32 %v1262, 0.35355338
  %v1268 = vmul.f32 %v1265, 0.35355338
  %v1269 = vadd.f32 %v1267, %v60
  %v1270 = vadd.f32 %v1268, %v61
  %v1271 = vsel %vm208, %v1269, -inf
  %1272 = vmax.xlane.f32.xlu0 %v1271
  %v1273 = vpop.xlane.xlu0 %1272
  %v1274 = vsel %vm208, %v1270, -inf
  %1275 = vmax.xlane.f32.xlu0 %v1274
  %v1276 = vpop.xlane.xlu0 %1275
  %v1277 = vsub.f32 %v1269, %v1273
  %v1278 = vsub.f32 %v1270, %v1276
  %v1279 = vmul.f32 %v1277, 1.442695
  %v1280 = vpow.pop %v1279
  %v1281 = vmul.f32 %v1278, 1.442695
  %v1282 = vpow.pop %v1281
  %v1283 = vsel %vm208, %v1280, 0.0
  %1284 = vadd.xlane.f32.xlu0 %v1283
  %v1285 = vpop.xlane.xlu0 %1284
  %v1286 = vsel %vm208, %v1282, 0.0
  %1287 = vadd.xlane.f32.xlu0 %v1286
  %v1288 = vpop.xlane.xlu0 %1287
  %v1289 = vrcp.pop %v1285
  %v1290 = vrcp.pop %v1288
  %v1291 = vmul.f32 %v1280, %v1289
  %v1292 = vmul.f32 %v1282, %v1290
  %1293 = vrot.lane.b32.xlu0 %v926, 40
  %v1294 = vpop.permute.xlu0 %1293
  %1295 = vrot.lane.b32.xlu0 %v928, 40
  %v1296 = vpop.permute.xlu0 %1295
  %v1300 = vsel %vm208, %v1291, 0
  %v1303 = vsel %vm208, %v1292, 0
  %1305 = vmatpush.msra.mxu0 0.0
  %1306 = vmatpush.msra.mxu0 0.0
  %1307 = vmatpush.msra.mxu0 0.0
  %1308 = vmatpush.msra.mxu0 0.0
  %1309 = vmatpush.msra.mxu0 0.0
  %1310 = vmatpush.msra.mxu0 0.0
  %1311 = vmatpush.msra.mxu0 0.0
  %1312 = vmatpush.msra.mxu0 0.0
  %1313 = vmatpush.msra.mxu0 0.0
  %1314 = vmatpush.msra.mxu0 0.0
  %1315 = vmatpush.msra.mxu0 0.0
  %1316 = vmatpush.msra.mxu0 0.0
  %1317 = vmatpush.msra.mxu0 0.0
  %1318 = vmatpush.msra.mxu0 0.0
  %1319 = vmatpush.msra.mxu0 %v1296
  %1320 = vmatpush.msra.mxu0 %v1294
  %1321 = vmatmul.f32.gmra.mxu0 %v1300
  %v1322 = vpop.f32.mrf.mxu0
  %v1323 = vadd.f32 0.0, %v1322
  %1324 = vmatmul.f32.gmra.mxu0 %v1303
  %v1325 = vpop.f32.mrf.mxu0
  %v1326 = vadd.f32 0.0, %v1325
  %1327 = vdwg.mxu0
  %1330 = vrot.lane.b32.xlu0 %v1123, 8
  %v1331 = vpop.permute.xlu0 %1330
  %1332 = vrot.lane.b32.xlu0 %v1126, 8
  %v1333 = vpop.permute.xlu0 %1332
  %1338 = vrot.lane.b32.xlu0 %v1223, 16
  %v1339 = vpop.permute.xlu0 %1338
  %1340 = vrot.lane.b32.xlu0 %v1226, 16
  %v1341 = vpop.permute.xlu0 %1340
  %1346 = vrot.lane.b32.xlu0 %v1323, 24
  %v1347 = vpop.permute.xlu0 %1346
  %1348 = vrot.lane.b32.xlu0 %v1326, 24
  %v1349 = vpop.permute.xlu0 %1348
  %v1352 = vsel %vm172, %v1023, %v1331
  %v1353 = vsel %vm172, %v1026, %v1333
  %v1354 = vsel %vm208, %v1352, %v1339
  %v1355 = vsel %vm208, %v1353, %v1341
  %v1356 = vsel %vm594, %v1354, %v1347
  %v1357 = vsel %vm594, %v1355, %v1349
  %s1358 = scalar_lea.vmem %s6, 16
  %v1359 = vld [vmem:[%s1358] sm:$0xf]
  %v1360 = vld [vmem:[%s1358 + $0x4] sm:$0xf]
  %v1361 = vld [vmem:[%s1358 + $0x8] sm:$0xf]
  %v1362 = vld [vmem:[%s1358 + $0xc] sm:$0xf]
  %v1363 = vpack.c.bf16 %v1357, %v1356
  %s1364 = scalar_lea.vmem %s7, 1
  %v1365 = vld [vmem:[%s1364] sm:$0x1]
  %v1367 = vperm.slane %v1365, 0
  %v1373 = vunpack.c.l.b16 %v1359
  %v1374 = vunpack.c.l.b16 %v1360
  %v1375 = vunpack.c.l.b16 %v1361
  %v1376 = vunpack.c.l.b16 %v1362
  %v1377 = vpack.c.b16 %v1374, %v1373
  %v1378 = vpack.c.b16 %v1376, %v1375
  %v1382 = vsel %vm66, %v1363, 0
  %1384 = vmatpush.bf16.msra.mxu0 0
  %1385 = vmatpush.bf16.msra.mxu0 0
  %1386 = vmatpush.bf16.msra.mxu0 0
  %1387 = vmatpush.bf16.msra.mxu0 0
  %1388 = vmatpush.bf16.msra.mxu0 0
  %1389 = vmatpush.bf16.msra.mxu0 0
  %1390 = vmatpush.bf16.msra.mxu0 %v1378
  %1391 = vmatpush.bf16.msra.mxu0 %v1377
  %1392 = vmatmul.bf16.gmra.mxu0 %v1382
  %v1393 = vpop.f32.mrf.mxu0
  %v1394 = vadd.f32 %v1367, %v1393
  %v1395 = vpop.f32.mrf.mxu0
  %v1396 = vadd.f32 %v1367, %v1395
  %1397 = vdwg.mxu0
  %v1398 = vadd.f32 %v1394, %v888
  %v1399 = vadd.f32 %v1396, %v889
  %s1400 = scalar_lea.vmem %s8, 1
  %v1401 = vld [vmem:[%s1400] sm:$0x1]
  %s1402 = scalar_lea.vmem %s9, 1
  %v1403 = vld [vmem:[%s1402] sm:$0x1]
  %v1404 = vsel %vm66, %v1398, 0.0
  %1405 = vadd.xlane.f32.xlu0 %v1404
  %v1406 = vpop.xlane.xlu0 %1405
  %v1407 = vsel %vm66, %v1399, 0.0
  %1408 = vadd.xlane.f32.xlu0 %v1407
  %v1409 = vpop.xlane.xlu0 %1408
  %v1410 = vmul.f32 %v1406, %v79
  %v1411 = vmul.f32 %v1409, %v79
  %v1412 = vsub.f32 %v1398, %v1410
  %v1413 = vsub.f32 %v1399, %v1411
  %v1414 = vmul.f32 %v1412, %v1412
  %v1415 = vmul.f32 %v1413, %v1413
  %v1416 = vsel %vm66, %v1414, 0.0
  %1417 = vadd.xlane.f32.xlu0 %v1416
  %v1418 = vpop.xlane.xlu0 %1417
  %v1419 = vsel %vm66, %v1415, 0.0
  %1420 = vadd.xlane.f32.xlu0 %v1419
  %v1421 = vpop.xlane.xlu0 %1420
  %v1422 = vmul.f32 %v1418, %v79
  %v1423 = vmul.f32 %v1421, %v79
  %v1424 = vadd.f32 %v1422, 1e-12
  %v1425 = vadd.f32 %v1423, 1e-12
  %v1426 = vrsqrt.pop %v1424
  %v1427 = vmul.f32 %v1426, %v1424
  %v1428 = vmul.f32 %v1427, %v1426
  %v1429 = vmul.f32 0.5, %v1428
  %v1430 = vsub.f32 1.5, %v1429
  %v1431 = vmul.f32 %v1426, %v1430
  %vm1432 = vweird.f32 %v1424
  %vm1433 = vweird.f32 %v1426
  %vm1434 = vmor %vm1432, %vm1433
  %v1435 = vsel %vm1434, %v1426, %v1431
  %v1436 = vrsqrt.pop %v1425
  %v1437 = vmul.f32 %v1436, %v1425
  %v1438 = vmul.f32 %v1437, %v1436
  %v1439 = vmul.f32 0.5, %v1438
  %v1440 = vsub.f32 1.5, %v1439
  %v1441 = vmul.f32 %v1436, %v1440
  %vm1442 = vweird.f32 %v1425
  %vm1443 = vweird.f32 %v1436
  %vm1444 = vmor %vm1442, %vm1443
  %v1445 = vsel %vm1444, %v1436, %v1441
  %v1446 = vmul.f32 %v1412, %v1435
  %v1447 = vmul.f32 %v1413, %v1445
  %v1449 = vperm.slane %v1401, 0
  %v1451 = vmul.f32 %v1446, %v1449
  %v1452 = vmul.f32 %v1447, %v1449
  %v1454 = vperm.slane %v1403, 0
  %v1456 = vadd.f32 %v1451, %v1454
  %v1457 = vadd.f32 %v1452, %v1454
  %s1458 = scalar_lea.vmem %s10, 16
  %v1459 = vld [vmem:[%s1458] sm:$0xf]
  %v1460 = vld [vmem:[%s1458 + $0x4] sm:$0xf]
  %v1461 = vld [vmem:[%s1458 + $0x8] sm:$0xf]
  %v1462 = vld [vmem:[%s1458 + $0xc] sm:$0xf]
  %v1463 = vpack.c.bf16 %v1457, %v1456
  %s1464 = scalar_lea.vmem %s11, 1
  %v1465 = vld [vmem:[%s1464] sm:$0x1]
  %v1467 = vperm.slane %v1465, 0
  %v1473 = vunpack.c.l.b16 %v1459
  %v1474 = vunpack.c.l.b16 %v1460
  %v1475 = vunpack.c.l.b16 %v1461
  %v1476 = vunpack.c.l.b16 %v1462
  %v1477 = vpack.c.b16 %v1474, %v1473
  %v1478 = vpack.c.b16 %v1476, %v1475
  %v1482 = vsel %vm66, %v1463, 0
  %1484 = vmatpush.bf16.msra.mxu0 0
  %1485 = vmatpush.bf16.msra.mxu0 0
  %1486 = vmatpush.bf16.msra.mxu0 0
  %1487 = vmatpush.bf16.msra.mxu0 0
  %1488 = vmatpush.bf16.msra.mxu0 0
  %1489 = vmatpush.bf16.msra.mxu0 0
  %1490 = vmatpush.bf16.msra.mxu0 %v1478
  %1491 = vmatpush.bf16.msra.mxu0 %v1477
  %1492 = vmatmul.bf16.gmra.mxu0 %v1482
  %v1493 = vpop.f32.mrf.mxu0
  %v1494 = vadd.f32 %v1467, %v1493
  %v1495 = vpop.f32.mrf.mxu0
  %v1496 = vadd.f32 %v1467, %v1495
  %1497 = vdwg.mxu0
  %v1498 = vmul.f32 %v1494, 0.5
  %v1499 = vmul.f32 %v1496, 0.5
  %v1500 = vmul.f32 %v1494, 0.044715
  %v1501 = vmul.f32 %v1496, 0.044715
  %v1502 = vmul.f32 %v1500, %v1494
  %v1503 = vmul.f32 %v1501, %v1496
  %v1504 = vmul.f32 %v1502, %v1494
  %v1505 = vmul.f32 %v1503, %v1496
  %v1506 = vadd.f32 %v1494, %v1504
  %v1507 = vadd.f32 %v1496, %v1505
  %v1508 = vmul.f32 %v1506, 0.7978846
  %v1509 = vmul.f32 %v1507, 0.7978846
  %v1510 = vtanh.pop %v1508
  %v1511 = vtanh.pop %v1509
  %v1512 = vadd.f32 %v1510, 1.0
  %v1513 = vadd.f32 %v1511, 1.0
  %v1514 = vmul.f32 %v1498, %v1512
  %v1515 = vmul.f32 %v1499, %v1513
  %s1516 = scalar_lea.vmem %s12, 64
  %v1517 = vld [vmem:[%s1516] sm:$0xf]
  %v1518 = vld [vmem:[%s1516 + $0x4] sm:$0xf]
  %v1519 = vld [vmem:[%s1516 + $0x8] sm:$0xf]
  %v1520 = vld [vmem:[%s1516 + $0xc] sm:$0xf]
  %v1521 = vld [vmem:[%s1516 + $0x10] sm:$0xf]
  %v1522 = vld [vmem:[%s1516 + $0x14] sm:$0xf]
  %v1523 = vld [vmem:[%s1516 + $0x18] sm:$0xf]
  %v1524 = vld [vmem:[%s1516 + $0x1c] sm:$0xf]
  %v1525 = vld [vmem:[%s1516 + $0x20] sm:$0xf]
  %v1526 = vld [vmem:[%s1516 + $0x24] sm:$0xf]
  %v1527 = vld [vmem:[%s1516 + $0x28] sm:$0xf]
  %v1528 = vld [vmem:[%s1516 + $0x2c] sm:$0xf]
  %v1529 = vld [vmem:[%s1516 + $0x30] sm:$0xf]
  %v1530 = vld [vmem:[%s1516 + $0x34] sm:$0xf]
  %v1531 = vld [vmem:[%s1516 + $0x38] sm:$0xf]
  %v1532 = vld [vmem:[%s1516 + $0x3c] sm:$0xf]
  %v1533 = vpack.c.bf16 %v1515, %v1514
  %s1534 = scalar_lea.vmem %s13, 1
  %v1535 = vld [vmem:[%s1534] sm:$0x1]
  %v1537 = vperm.slane %v1535, 0
  %v1555 = vunpack.c.l.b16 %v1517
  %v1556 = vunpack.c.l.b16 %v1518
  %v1557 = vunpack.c.l.b16 %v1519
  %v1558 = vunpack.c.l.b16 %v1520
  %v1559 = vunpack.c.l.b16 %v1521
  %v1560 = vunpack.c.l.b16 %v1522
  %v1561 = vunpack.c.l.b16 %v1523
  %v1562 = vunpack.c.l.b16 %v1524
  %v1563 = vunpack.c.l.b16 %v1525
  %v1564 = vunpack.c.l.b16 %v1526
  %v1565 = vunpack.c.l.b16 %v1527
  %v1566 = vunpack.c.l.b16 %v1528
  %v1567 = vunpack.c.l.b16 %v1529
  %v1568 = vunpack.c.l.b16 %v1530
  %v1569 = vunpack.c.l.b16 %v1531
  %v1570 = vunpack.c.l.b16 %v1532
  %v1571 = vpack.c.b16 %v1556, %v1555
  %v1572 = vpack.c.b16 %v1558, %v1557
  %v1573 = vpack.c.b16 %v1560, %v1559
  %v1574 = vpack.c.b16 %v1562, %v1561
  %v1575 = vpack.c.b16 %v1564, %v1563
  %v1576 = vpack.c.b16 %v1566, %v1565
  %v1577 = vpack.c.b16 %v1568, %v1567
  %v1578 = vpack.c.b16 %v1570, %v1569
  %1587 = vmatpush.bf16.msra.mxu0 %v1578
  %1588 = vmatpush.bf16.msra.mxu0 %v1577
  %1589 = vmatpush.bf16.msra.mxu0 %v1576
  %1590 = vmatpush.bf16.msra.mxu0 %v1575
  %1591 = vmatpush.bf16.msra.mxu0 %v1574
  %1592 = vmatpush.bf16.msra.mxu0 %v1573
  %1593 = vmatpush.bf16.msra.mxu0 %v1572
  %1594 = vmatpush.bf16.msra.mxu0 %v1571
  %1595 = vmatmul.bf16.gmra.mxu0 %v1533
  %v1596 = vpop.f32.mrf.mxu0
  %v1597 = vadd.f32 %v1537, %v1596
  %v1598 = vpop.f32.mrf.mxu0
  %v1599 = vadd.f32 %v1537, %v1598
  %1600 = vdwg.mxu0
  %v1601 = vadd.f32 %v1597, %v1456
  %v1602 = vadd.f32 %v1599, %v1457
  %s1603 = scalar_lea.vmem %s14, 1
  %v1604 = vld [vmem:[%s1603] sm:$0x1]
  %s1605 = scalar_lea.vmem %s15, 1
  %v1606 = vld [vmem:[%s1605] sm:$0x1]
  %v1607 = vsel %vm66, %v1601, 0.0
  %1608 = vadd.xlane.f32.xlu0 %v1607
  %v1609 = vpop.xlane.xlu0 %1608
  %v1610 = vsel %vm66, %v1602, 0.0
  %1611 = vadd.xlane.f32.xlu0 %v1610
  %v1612 = vpop.xlane.xlu0 %1611
  %v1613 = vmul.f32 %v1609, %v79
  %v1614 = vmul.f32 %v1612, %v79
  %v1615 = vsub.f32 %v1601, %v1613
  %v1616 = vsub.f32 %v1602, %v1614
  %v1617 = vmul.f32 %v1615, %v1615
  %v1618 = vmul.f32 %v1616, %v1616
  %v1619 = vsel %vm66, %v1617, 0.0
  %1620 = vadd.xlane.f32.xlu0 %v1619
  %v1621 = vpop.xlane.xlu0 %1620
  %v1622 = vsel %vm66, %v1618, 0.0
  %1623 = vadd.xlane.f32.xlu0 %v1622
  %v1624 = vpop.xlane.xlu0 %1623
  %v1625 = vmul.f32 %v1621, %v79
  %v1626 = vmul.f32 %v1624, %v79
  %v1627 = vadd.f32 %v1625, 1e-12
  %v1628 = vadd.f32 %v1626, 1e-12
  %v1629 = vrsqrt.pop %v1627
  %v1630 = vmul.f32 %v1629, %v1627
  %v1631 = vmul.f32 %v1630, %v1629
  %v1632 = vmul.f32 0.5, %v1631
  %v1633 = vsub.f32 1.5, %v1632
  %v1634 = vmul.f32 %v1629, %v1633
  %vm1635 = vweird.f32 %v1627
  %vm1636 = vweird.f32 %v1629
  %vm1637 = vmor %vm1635, %vm1636
  %v1638 = vsel %vm1637, %v1629, %v1634
  %v1639 = vrsqrt.pop %v1628
  %v1640 = vmul.f32 %v1639, %v1628
  %v1641 = vmul.f32 %v1640, %v1639
  %v1642 = vmul.f32 0.5, %v1641
  %v1643 = vsub.f32 1.5, %v1642
  %v1644 = vmul.f32 %v1639, %v1643
  %vm1645 = vweird.f32 %v1628
  %vm1646 = vweird.f32 %v1639
  %vm1647 = vmor %vm1645, %vm1646
  %v1648 = vsel %vm1647, %v1639, %v1644
  %v1649 = vmul.f32 %v1615, %v1638
  %v1650 = vmul.f32 %v1616, %v1648
  %v1652 = vperm.slane %v1604, 0
  %v1654 = vmul.f32 %v1649, %v1652
  %v1655 = vmul.f32 %v1650, %v1652
  %v1657 = vperm.slane %v1606, 0
  %v1659 = vadd.f32 %v1654, %v1657
  %v1660 = vadd.f32 %v1655, %v1657
  %v1661 = vld [vmem:[%s16] sm:$0xff]
  %v1662 = vld [vmem:[%s16 + $0x8] sm:$0xff]
  %v1663 = vld [vmem:[%s16 + $0x10] sm:$0xff]
  %v1664 = vld [vmem:[%s16 + $0x18] sm:$0xff]
  %v1665 = vld [vmem:[%s17] sm:$0x1]
  %v1667 = vperm.slane %v1665, 0
  %v1670 = vsel %vm66, %v1659, 0
  %v1673 = vsel %vm66, %v1660, 0
  %1675 = vmatpush.msra.mxu0 0.0
  %1676 = vmatpush.msra.mxu0 0.0
  %1677 = vmatpush.msra.mxu0 0.0
  %1678 = vmatpush.msra.mxu0 0.0
  %1679 = vmatpush.msra.mxu0 0.0
  %1680 = vmatpush.msra.mxu0 0.0
  %1681 = vmatpush.msra.mxu0 0.0
  %1682 = vmatpush.msra.mxu0 0.0
  %1683 = vmatpush.msra.mxu0 0.0
  %1684 = vmatpush.msra.mxu0 0.0
  %1685 = vmatpush.msra.mxu0 0.0
  %1686 = vmatpush.msra.mxu0 0.0
  %1687 = vmatpush.msra.mxu0 %v1664
  %1688 = vmatpush.msra.mxu0 %v1663
  %1689 = vmatpush.msra.mxu0 %v1662
  %1690 = vmatpush.msra.mxu0 %v1661
  %1691 = vmatmul.f32.gmra.mxu0 %v1670
  %v1692 = vpop.f32.mrf.mxu0
  %v1693 = vadd.f32 %v1667, %v1692
  %1694 = vmatmul.f32.gmra.mxu0 %v1673
  %v1695 = vpop.f32.mrf.mxu0
  %v1696 = vadd.f32 %v1667, %v1695
  %1697 = vdwg.mxu0
  %1698 = vst [vmem:[%s18] sm:$0xff] %v1693
  %1699 = vst [vmem:[%s18 + $0x8] sm:$0xff] %v1696
  // Predicated region
  $region74: #{model_forward.1} parent=0 // pred_check
    _
  $region75: #{model_forward.1} parent=0 // pred_check_branch
    %1701 = sbr.rel (0) target = $region77
  $region76: #{model_forward.1} parent=0 // pred_region
    _
  $region77: #{model_forward.1} parent=0 // pred_fallthru
    _
  // Predicated region
  $region78: #{model_forward.1} parent=0 // pred_check
    _
  $region79: #{model_forward.1} parent=0 // pred_check_branch
    %1703 = sbr.rel (0) target = $region81
  $region80: #{model_forward.1} parent=0 // pred_region
    _
  $region81: #{model_forward.1} parent=0 // pred_fallthru
    _

</llo_original>
